<compile_context>
chip_gen: v7x
topology: tpu7x:2x2x1
jax: 0.10.0
libtpu: 0.0.40
codegen_flags: <defaults>
</compile_context>

<pallas_src>
import functools

import jax
import jax.numpy as jnp
from jax import lax
from jax.experimental import pallas as pl
from jax.experimental.pallas import tpu as pltpu

EPS = 1e-5


def _stats_kernel(x_ref, g_ref, b_ref, scale_ref, bias_ref,
                  sum_acc, sq_acc, *, s_total, count, s_tile, acc_w):
    """Accumulate per-channel sum / sumsq over (N, S) tiles; finalize scale/bias."""
    n = pl.program_id(1)
    si = pl.program_id(2)

    @pl.when(jnp.logical_and(n == 0, si == 0))
    def _init():
        sum_acc[...] = jnp.zeros_like(sum_acc)
        sq_acc[...] = jnp.zeros_like(sq_acc)

    x = x_ref[0].astype(jnp.float32)                       # (C_TILE, S_TILE)
    # Mask lanes past the true spatial extent (partial last S tile).
    lane = lax.broadcasted_iota(jnp.int32, x.shape, 1)
    valid = (si * s_tile + lane) < s_total
    x = jnp.where(valid, x, 0.0)

    # Elementwise partial accumulation into (C_TILE, acc_w) f32 scratch (pure VPU);
    # the single cross-lane reduce happens only at finalize.
    n_chunks = s_tile // acc_w
    for j in range(n_chunks):
        chunk = x[:, j * acc_w:(j + 1) * acc_w]
        sum_acc[...] += chunk
        sq_acc[...] += chunk * chunk

    @pl.when(jnp.logical_and(n == pl.num_programs(1) - 1,
                             si == pl.num_programs(2) - 1))
    def _finalize():
        inv_count = jnp.float32(1.0 / count)
        s1 = jnp.sum(sum_acc[...], axis=-1, keepdims=True)   # (C_TILE, 1)
        s2 = jnp.sum(sq_acc[...], axis=-1, keepdims=True)    # (C_TILE, 1)
        mean = s1 * inv_count
        var = jnp.maximum(s2 * inv_count - mean * mean, 0.0)  # biased variance
        inv_std = lax.rsqrt(var + EPS)
        scale = g_ref[...] * inv_std                          # (C_TILE, 1)
        scale_ref[...] = scale
        bias_ref[...] = b_ref[...] - mean * scale


def _norm_kernel(x_ref, scale_ref, bias_ref, o_ref):
    """y = x * scale + bias with per-channel folded scale/bias (2 ops/element)."""
    x = x_ref[0].astype(jnp.float32)                         # (C_TILE, S_TILE)
    o_ref[0] = (x * scale_ref[...] + bias_ref[...]).astype(o_ref.dtype)


def batchnorm2d(x_nchw, gamma, beta, *, c_tile=128, s_tile=512):
    """Training-mode BatchNorm2d forward. x_nchw: (N,C,H,W); gamma,beta: (C,)."""
    N, C, H, W = x_nchw.shape
    S = H * W
    x3 = x_nchw.reshape(N, C, S)          # free reshape, no transpose

    # Lane (last) tile: multiple of 128, or the full (small) extent.
    if S >= 128:
        s_tile = min(s_tile, (S // 128) * 128)
    else:
        s_tile = S
    acc_w = min(s_tile, 128)
    # Sublane (channel) tile: multiple of 8, or the full extent.
    c_tile = min(c_tile, C)
    if c_tile != C:
        c_tile = max(8, (c_tile // 8) * 8)

    n_c = pl.cdiv(C, c_tile)
    n_s = pl.cdiv(S, s_tile)
    count = float(N * S)

    g2d = gamma.reshape(C, 1).astype(jnp.float32)
    b2d = beta.reshape(C, 1).astype(jnp.float32)

    # ---- Pass 1: per-channel statistics -> folded (scale, bias) -------------
    scale, bias = pl.pallas_call(
        functools.partial(_stats_kernel, s_total=S, count=count,
                          s_tile=s_tile, acc_w=acc_w),
        out_shape=(jax.ShapeDtypeStruct((C, 1), jnp.float32),
                   jax.ShapeDtypeStruct((C, 1), jnp.float32)),
        grid=(n_c, N, n_s),
        in_specs=[
            pl.BlockSpec((1, c_tile, s_tile), lambda ci, n, si: (n, ci, si)),
            pl.BlockSpec((c_tile, 1), lambda ci, n, si: (ci, 0)),
            pl.BlockSpec((c_tile, 1), lambda ci, n, si: (ci, 0)),
        ],
        out_specs=(
            pl.BlockSpec((c_tile, 1), lambda ci, n, si: (ci, 0)),
            pl.BlockSpec((c_tile, 1), lambda ci, n, si: (ci, 0)),
        ),
        scratch_shapes=[pltpu.VMEM((c_tile, acc_w), jnp.float32),
                        pltpu.VMEM((c_tile, acc_w), jnp.float32)],
        compiler_params=pltpu.CompilerParams(
            dimension_semantics=("parallel", "arbitrary", "arbitrary"),
            vmem_limit_bytes=32 * 1024 * 1024),
    )(x3, g2d, b2d)

    # ---- Pass 2: normalize (pipelined elementwise pass) ----------------------
    out3 = pl.pallas_call(
        _norm_kernel,
        out_shape=jax.ShapeDtypeStruct((N, C, S), x_nchw.dtype),
        grid=(N, n_c, n_s),
        in_specs=[
            pl.BlockSpec((1, c_tile, s_tile), lambda n, ci, si: (n, ci, si)),
            pl.BlockSpec((c_tile, 1), lambda n, ci, si: (ci, 0)),
            pl.BlockSpec((c_tile, 1), lambda n, ci, si: (ci, 0)),
        ],
        out_specs=pl.BlockSpec((1, c_tile, s_tile), lambda n, ci, si: (n, ci, si)),
        compiler_params=pltpu.CompilerParams(
            dimension_semantics=("parallel", "parallel", "arbitrary"),
            vmem_limit_bytes=32 * 1024 * 1024),
    )(x3, scale, bias)

    return out3.reshape(N, C, H, W)


def _reference(x_nchw, gamma, beta):
    x = x_nchw.astype(jnp.float32)
    mean = jnp.mean(x, axis=(0, 2, 3), keepdims=True)
    var = jnp.mean((x - mean) ** 2, axis=(0, 2, 3), keepdims=True)
    return ((x - mean) / jnp.sqrt(var + EPS)) * gamma[None, :, None, None] \
        + beta[None, :, None, None]


if __name__ == "__main__":
    # Exact module shape: (1, 992, 14, 14) -- already small (~0.78 MB).
    N, C, H, W = 1, 992, 14, 14
    key = jax.random.PRNGKey(0)
    kx, kg, kb = jax.random.split(key, 3)

    x = jax.random.normal(kx, (N, C, H, W), dtype=jnp.float32)
    # PyTorch default init is gamma=1, beta=0; use fixed non-trivial values so
    # the affine path is actually exercised.
    gamma = jax.random.normal(kg, (C,), dtype=jnp.float32) * 0.1 + 1.0
    beta = jax.random.normal(kb, (C,), dtype=jnp.float32) * 0.1

    bn = jax.jit(batchnorm2d)
    out = jax.block_until_ready(bn(x, gamma, beta))

    ref = _reference(x, gamma, beta)
    assert out.shape == (N, C, H, W)
    err = float(jnp.max(jnp.abs(out - ref)))
    assert jnp.allclose(out, ref, atol=1e-4, rtol=1e-4), f"max abs err {err}"

    print("KERNEL_OK")
</pallas_src>

<mosaic_0001>
module attributes {stable_mosaic.version = 11 : i64} {
  func.func @_stats_kernel(%arg0: i32, %arg1: i32, %arg2: i32, %arg3: memref<1x128x128xf32, #tpu.memory_space<vmem>>, %arg4: memref<128x1xf32, #tpu.memory_space<vmem>>, %arg5: memref<128x1xf32, #tpu.memory_space<vmem>>, %arg6: memref<128x1xf32, #tpu.memory_space<vmem>>, %arg7: memref<128x1xf32, #tpu.memory_space<vmem>>, %arg8: memref<128x128xf32, #tpu.memory_space<vmem>>, %arg9: memref<128x128xf32, #tpu.memory_space<vmem>>) attributes {dimension_semantics = [#tpu.dimension_semantics<parallel>, #tpu.dimension_semantics<arbitrary>, #tpu.dimension_semantics<arbitrary>], iteration_bounds = array<i64: 8, 1, 2>, scalar_prefetch = 0 : i64, scratch_operands = 2 : i64, tpu.core_type = #tpu.core_type<tc>, window_params = [{transform_indices = @transform_0, window_bounds = array<i64: 1, 128, 128>}, {transform_indices = @transform_1, window_bounds = array<i64: 128, 1>}, {transform_indices = @transform_2, window_bounds = array<i64: 128, 1>}, {transform_indices = @transform_3, window_bounds = array<i64: 128, 1>}, {transform_indices = @transform_4, window_bounds = array<i64: 128, 1>}]} {
    %c0_i32 = arith.constant 0 : i32
    %0 = arith.cmpi eq, %arg1, %c0_i32 : i32
    %c0_i32_0 = arith.constant 0 : i32
    %1 = arith.cmpi eq, %arg2, %c0_i32_0 : i32
    %2 = arith.andi %0, %1 : i1
    %3 = arith.extui %2 : i1 to i32
    %c0_i32_1 = arith.constant 0 : i32
    %4 = arith.cmpi ne, %3, %c0_i32_1 : i32
    scf.if %4 {
      %cst_14 = arith.constant 0.000000e+00 : f32
      %27 = vector.broadcast %cst_14 : f32 to vector<128x128xf32>
      %c0_15 = arith.constant 0 : index
      %c0_16 = arith.constant 0 : index
      %28 = vector.load %arg8[%c0_15, %c0_16] : memref<128x128xf32, #tpu.memory_space<vmem>>, vector<128x128xf32>
      tpu.vector_store %arg8[%c0_15, %c0_16], %27 {strides = array<i32>} : memref<128x128xf32, #tpu.memory_space<vmem>>, vector<128x128xf32>,
      %cst_17 = arith.constant 0.000000e+00 : f32
      %29 = vector.broadcast %cst_17 : f32 to vector<128x128xf32>
      %c0_18 = arith.constant 0 : index
      %c0_19 = arith.constant 0 : index
      %30 = vector.load %arg9[%c0_18, %c0_19] : memref<128x128xf32, #tpu.memory_space<vmem>>, vector<128x128xf32>
      tpu.vector_store %arg9[%c0_18, %c0_19], %29 {strides = array<i32>} : memref<128x128xf32, #tpu.memory_space<vmem>>, vector<128x128xf32>,
    } else {
    }
    %c0 = arith.constant 0 : index
    %c0_2 = arith.constant 0 : index
    %c0_3 = arith.constant 0 : index
    %5 = vector.load %arg3[%c0, %c0_2, %c0_3] : memref<1x128x128xf32, #tpu.memory_space<vmem>>, vector<1x128x128xf32>
    %6 = vector.shape_cast %5 : vector<1x128x128xf32> to vector<128x128xf32>
    %7 = tpu.iota {dimensions = array<i32: 1>} : vector<128x128xi32>
    %c128_i32 = arith.constant 128 : i32
    %8 = arith.muli %arg2, %c128_i32 : i32
    %9 = vector.broadcast %8 : i32 to vector<128x128xi32>
    %10 = arith.addi %9, %7 : vector<128x128xi32>
    %c196_i32 = arith.constant 196 : i32
    %11 = vector.broadcast %c196_i32 : i32 to vector<128x128xi32>
    %12 = arith.cmpi slt, %10, %11 : vector<128x128xi32>
    %cst = arith.constant 0.000000e+00 : f32
    %13 = vector.broadcast %cst : f32 to vector<128x128xf32>
    %14 = arith.select %12, %6, %13 : vector<128x128xi1>, vector<128x128xf32>
    %c0_4 = arith.constant 0 : index
    %c0_5 = arith.constant 0 : index
    %15 = vector.load %arg8[%c0_4, %c0_5] : memref<128x128xf32, #tpu.memory_space<vmem>>, vector<128x128xf32>
    %16 = arith.addf %15, %14 : vector<128x128xf32>
    %c0_6 = arith.constant 0 : index
    %c0_7 = arith.constant 0 : index
    %17 = vector.load %arg8[%c0_6, %c0_7] : memref<128x128xf32, #tpu.memory_space<vmem>>, vector<128x128xf32>
    tpu.vector_store %arg8[%c0_6, %c0_7], %16 {strides = array<i32>} : memref<128x128xf32, #tpu.memory_space<vmem>>, vector<128x128xf32>,
    %c0_8 = arith.constant 0 : index
    %c0_9 = arith.constant 0 : index
    %18 = vector.load %arg9[%c0_8, %c0_9] : memref<128x128xf32, #tpu.memory_space<vmem>>, vector<128x128xf32>
    %19 = arith.mulf %14, %14 : vector<128x128xf32>
    %20 = arith.addf %18, %19 : vector<128x128xf32>
    %c0_10 = arith.constant 0 : index
    %c0_11 = arith.constant 0 : index
    %21 = vector.load %arg9[%c0_10, %c0_11] : memref<128x128xf32, #tpu.memory_space<vmem>>, vector<128x128xf32>
    tpu.vector_store %arg9[%c0_10, %c0_11], %20 {strides = array<i32>} : memref<128x128xf32, #tpu.memory_space<vmem>>, vector<128x128xf32>,
    %c0_i32_12 = arith.constant 0 : i32
    %22 = arith.cmpi eq, %arg1, %c0_i32_12 : i32
    %c1_i32 = arith.constant 1 : i32
    %23 = arith.cmpi eq, %arg2, %c1_i32 : i32
    %24 = arith.andi %22, %23 : i1
    %25 = arith.extui %24 : i1 to i32
    %c0_i32_13 = arith.constant 0 : i32
    %26 = arith.cmpi ne, %25, %c0_i32_13 : i32
    scf.if %26 {
      %c0_14 = arith.constant 0 : index
      %c0_15 = arith.constant 0 : index
      %27 = vector.load %arg8[%c0_14, %c0_15] : memref<128x128xf32, #tpu.memory_space<vmem>>, vector<128x128xf32>
      %cst_16 = arith.constant dense<0.000000e+00> : vector<128xf32>
      %28 = vector.multi_reduction <add>, %27, %cst_16 [1] : vector<128x128xf32> to vector<128xf32>
      %29 = vector.shape_cast %28 : vector<128xf32> to vector<128x1xf32>
      %c0_17 = arith.constant 0 : index
      %c0_18 = arith.constant 0 : index
      %30 = vector.load %arg9[%c0_17, %c0_18] : memref<128x128xf32, #tpu.memory_space<vmem>>, vector<128x128xf32>
      %cst_19 = arith.constant dense<0.000000e+00> : vector<128xf32>
      %31 = vector.multi_reduction <add>, %30, %cst_19 [1] : vector<128x128xf32> to vector<128xf32>
      %32 = vector.shape_cast %31 : vector<128xf32> to vector<128x1xf32>
      %cst_20 = arith.constant 0.00510204071 : f32
      %33 = vector.broadcast %cst_20 : f32 to vector<128x1xf32>
      %34 = arith.mulf %29, %33 : vector<128x1xf32>
      %cst_21 = arith.constant 0.00510204071 : f32
      %35 = vector.broadcast %cst_21 : f32 to vector<128x1xf32>
      %36 = arith.mulf %32, %35 : vector<128x1xf32>
      %37 = arith.mulf %34, %34 : vector<128x1xf32>
      %38 = arith.subf %36, %37 : vector<128x1xf32>
      %cst_22 = arith.constant 0.000000e+00 : f32
      %39 = vector.broadcast %cst_22 : f32 to vector<128x1xf32>
      %40 = arith.maximumf %38, %39 : vector<128x1xf32>
      %cst_23 = arith.constant 9.99999974E-6 : f32
      %41 = vector.broadcast %cst_23 : f32 to vector<128x1xf32>
      %42 = arith.addf %40, %41 : vector<128x1xf32>
      %43 = math.rsqrt %42 : vector<128x1xf32>
      %c0_24 = arith.constant 0 : index
      %c0_25 = arith.constant 0 : index
      %44 = vector.load %arg4[%c0_24, %c0_25] : memref<128x1xf32, #tpu.memory_space<vmem>>, vector<128x1xf32>
      %45 = arith.mulf %44, %43 : vector<128x1xf32>
      %c0_26 = arith.constant 0 : index
      %c0_27 = arith.constant 0 : index
      %46 = vector.load %arg6[%c0_26, %c0_27] : memref<128x1xf32, #tpu.memory_space<vmem>>, vector<128x1xf32>
      tpu.vector_store %arg6[%c0_26, %c0_27], %45 {strides = array<i32>} : memref<128x1xf32, #tpu.memory_space<vmem>>, vector<128x1xf32>,
      %c0_28 = arith.constant 0 : index
      %c0_29 = arith.constant 0 : index
      %47 = vector.load %arg5[%c0_28, %c0_29] : memref<128x1xf32, #tpu.memory_space<vmem>>, vector<128x1xf32>
      %48 = arith.mulf %34, %45 : vector<128x1xf32>
      %49 = arith.subf %47, %48 : vector<128x1xf32>
      %c0_30 = arith.constant 0 : index
      %c0_31 = arith.constant 0 : index
      %50 = vector.load %arg7[%c0_30, %c0_31] : memref<128x1xf32, #tpu.memory_space<vmem>>, vector<128x1xf32>
      tpu.vector_store %arg7[%c0_30, %c0_31], %49 {strides = array<i32>} : memref<128x1xf32, #tpu.memory_space<vmem>>, vector<128x1xf32>,
    } else {
    }
    return
  }
  func.func @transform_0(%arg0: i32, %arg1: i32, %arg2: i32) -> (i32, i32, i32) {
    %c0_i32 = arith.constant 0 : i32
    return %arg1, %arg0, %arg2 : i32, i32, i32
  }
  func.func @transform_1(%arg0: i32, %arg1: i32, %arg2: i32) -> (i32, i32) {
    %c0_i32 = arith.constant 0 : i32
    %c0_i32_0 = arith.constant 0 : i32
    return %arg0, %c0_i32 : i32, i32
  }
  func.func @transform_2(%arg0: i32, %arg1: i32, %arg2: i32) -> (i32, i32) {
    %c0_i32 = arith.constant 0 : i32
    %c0_i32_0 = arith.constant 0 : i32
    return %arg0, %c0_i32 : i32, i32
  }
  func.func @transform_3(%arg0: i32, %arg1: i32, %arg2: i32) -> (i32, i32) {
    %c0_i32 = arith.constant 0 : i32
    %c0_i32_0 = arith.constant 0 : i32
    return %arg0, %c0_i32 : i32, i32
  }
  func.func @transform_4(%arg0: i32, %arg1: i32, %arg2: i32) -> (i32, i32) {
    %c0_i32 = arith.constant 0 : i32
    %c0_i32_0 = arith.constant 0 : i32
    return %arg0, %c0_i32 : i32, i32
  }
}

module attributes {stable_mosaic.version = 11 : i64} {
  func.func @_norm_kernel(%arg0: i32, %arg1: i32, %arg2: i32, %arg3: memref<1x128x128xf32, #tpu.memory_space<vmem>>, %arg4: memref<128x1xf32, #tpu.memory_space<vmem>>, %arg5: memref<128x1xf32, #tpu.memory_space<vmem>>, %arg6: memref<1x128x128xf32, #tpu.memory_space<vmem>>) attributes {dimension_semantics = [#tpu.dimension_semantics<parallel>, #tpu.dimension_semantics<parallel>, #tpu.dimension_semantics<arbitrary>], iteration_bounds = array<i64: 1, 8, 2>, scalar_prefetch = 0 : i64, scratch_operands = 0 : i64, tpu.core_type = #tpu.core_type<tc>, window_params = [{transform_indices = @transform_0, window_bounds = array<i64: 1, 128, 128>}, {transform_indices = @transform_1, window_bounds = array<i64: 128, 1>}, {transform_indices = @transform_2, window_bounds = array<i64: 128, 1>}, {transform_indices = @transform_3, window_bounds = array<i64: 1, 128, 128>}]} {
    %c0 = arith.constant 0 : index
    %c0_0 = arith.constant 0 : index
    %c0_1 = arith.constant 0 : index
    %0 = vector.load %arg3[%c0, %c0_0, %c0_1] : memref<1x128x128xf32, #tpu.memory_space<vmem>>, vector<1x128x128xf32>
    %1 = vector.shape_cast %0 : vector<1x128x128xf32> to vector<128x128xf32>
    %c0_2 = arith.constant 0 : index
    %c0_3 = arith.constant 0 : index
    %2 = vector.load %arg4[%c0_2, %c0_3] : memref<128x1xf32, #tpu.memory_space<vmem>>, vector<128x1xf32>
    %3 = vector.broadcast %2 : vector<128x1xf32> to vector<128x128xf32>
    %4 = arith.mulf %1, %3 : vector<128x128xf32>
    %c0_4 = arith.constant 0 : index
    %c0_5 = arith.constant 0 : index
    %5 = vector.load %arg5[%c0_4, %c0_5] : memref<128x1xf32, #tpu.memory_space<vmem>>, vector<128x1xf32>
    %6 = vector.broadcast %5 : vector<128x1xf32> to vector<128x128xf32>
    %7 = arith.addf %4, %6 : vector<128x128xf32>
    %c0_6 = arith.constant 0 : index
    %c0_7 = arith.constant 0 : index
    %c0_8 = arith.constant 0 : index
    %8 = vector.load %arg6[%c0_6, %c0_7, %c0_8] : memref<1x128x128xf32, #tpu.memory_space<vmem>>, vector<1x128x128xf32>
    %9 = vector.shape_cast %8 : vector<1x128x128xf32> to vector<128x128xf32>
    %10 = vector.shape_cast %7 : vector<128x128xf32> to vector<1x128x128xf32>
    tpu.vector_store %arg6[%c0_6, %c0_7, %c0_8], %10 {strides = array<i32>} : memref<1x128x128xf32, #tpu.memory_space<vmem>>, vector<1x128x128xf32>,
    return
  }
  func.func @transform_0(%arg0: i32, %arg1: i32, %arg2: i32) -> (i32, i32, i32) {
    %c0_i32 = arith.constant 0 : i32
    return %arg0, %arg1, %arg2 : i32, i32, i32
  }
  func.func @transform_1(%arg0: i32, %arg1: i32, %arg2: i32) -> (i32, i32) {
    %c0_i32 = arith.constant 0 : i32
    %c0_i32_0 = arith.constant 0 : i32
    return %arg1, %c0_i32 : i32, i32
  }
  func.func @transform_2(%arg0: i32, %arg1: i32, %arg2: i32) -> (i32, i32) {
    %c0_i32 = arith.constant 0 : i32
    %c0_i32_0 = arith.constant 0 : i32
    return %arg1, %c0_i32 : i32, i32
  }
  func.func @transform_3(%arg0: i32, %arg1: i32, %arg2: i32) -> (i32, i32, i32) {
    %c0_i32 = arith.constant 0 : i32
    return %arg0, %arg1, %arg2 : i32, i32, i32
  }
}

</mosaic_0001>

<llo_original>
// kernel: batchnorm2d.3
$region0: #{batchnorm2d.3}
  #allocation0 [shape = 'u32[]', space=smem, size = 0x4, offset = 0x4, fixed_abs, tag = 'smem constant byte address 0x4 - core index']
  #allocation1 [shape = 'u32[144,128]{1,0:T(1,128)}', space=vmem, size = 0x12000, scoped, tag = 'internal scratch']
  %s0 = inlined_call_operand.vmem [shape: f32[1,992,196], index: 0, kind: input, shape index: {}]
  %s1 = inlined_call_operand.vmem [shape: f32[992,1], index: 1, kind: input, shape index: {}]
  %s2 = inlined_call_operand.vmem [shape: f32[992,1], index: 2, kind: input, shape index: {}]
  %s3 = inlined_call_operand.vmem [shape: f32[1,992,196], index: 3, kind: output, shape index: {}]
  %s4 = sld [smem:[#allocation0]]
  $region145: #{batchnorm2d.3} parent=0
    _
  %s6 = ssub.s32 1, %s4
  %s7 = scalar_select 0, %s6, %s4
  $region1: #{batchnorm2d.3} parent=0
    #allocation2 [shape = 'u8[131072]{0}', space=vmem, size = 0x20000, scoped, tag = 'input window, operand 0']
    #allocation3 [shape = 'u8[131072]{0}', space=vmem, size = 0x20000, scoped, tag = 'output window, operand 0']
    loop: start=0, step=1, limit=18
    $region2: #{batchnorm2d.3} parent=1 // loop_pre_header
      _
    $region3: #{batchnorm2d.3} parent=1 // loop_header
      %s9 = sphi 0, %s13
      %p10 = scmp.ge.s32.totalorder %s9, 18
      %s16 = sphi 0, %s35
      %s17 = sphi 0, %s31
      %s18 = sphi 0, %s27
      %s19 = sphi 0, %s16
      %s20 = sphi 0, %s17
      %s21 = sphi 0, %s18
      %s22 = sphi 0, %s19
      %s23 = sphi 0, %s20
      %s24 = sphi 0, %s21
      %s42 = sphi 0, %s44
      %s45 = sphi 0, %s42
      %s46 = sphi 0, %s45
      %s62 = sphi 0, %s46
      %s68 = sphi 0, %s70
      %s71 = sphi 0, %s68
      %s72 = sphi 0, %s71
      %s88 = sphi 0, %s72
      %s94 = sphi 0, %s96
      %s97 = sphi 0, %s94
      %s98 = sphi 0, %s97
      %s114 = sphi 0, %s98
      %s124 = sphi 0, %s126
      %s127 = sphi 0, %s124
      %s128 = sphi 0, %s127
      %s144 = sphi 0, %s128
    $region4: #{batchnorm2d.3} parent=1 // loop_header_branch
      %12 = sbr.rel (%p10) target = $region8
    $region5: #{batchnorm2d.3} parent=1 // loop_body
      %s14 = ssub.s32 %s9, 1
      %s15 = ssub.s32 %s9, 2
      %s25 = sadd.s32 1, %s18
      %p26 = scmp.ge.s32.totalorder %s25, 2
      %s27 = scalar_select %p26, 0, %s25
      %s28 = sadd.s32 1, %s17
      %s29 = scalar_select %p26, %s28, %s17
      %p30 = scmp.ge.s32.totalorder %s29, 8
      %s31 = scalar_select %p30, 0, %s29
      %s32 = sadd.s32 1, %s16
      %s33 = scalar_select %p30, %s32, %s16
      %p34 = scmp.ge.s32.totalorder %s33, 1
      %s35 = scalar_select %p34, 0, %s33
      %s36 = ssub.s32 %s16, %s35
      %s37 = ssub.s32 %s17, %s31
      %s38 = sor.u32 %s36, %s37
      %s39 = ssub.s32 %s18, %s27
      %s40 = sor.u32 %s38, %s39
      %p41 = scmp.eq.s32.totalorder %s40, 0
      %s43 = sadd.s32 %s42, 1
      %s44 = scalar_select %p41, %s42, %s43
      %p47 = pneg %p41
      %p48 = scmp.eq.s32.totalorder %s9, 15
      %p49 = por %p47, %p48
      %p50 = scmp.ne.s32.totalorder %s42, %s45
      %p51 = scmp.eq.s32.totalorder %s9, 0
      %p52 = por %p50, %p51
      %p53 = scmp.ne.s32.totalorder %s42, %s45
      %p54 = scmp.eq.s32.totalorder %s14, 15
      %p55 = por %p53, %p54
      %p56 = scmp.ne.s32.totalorder %s45, %s46
      %p57 = scmp.eq.s32.totalorder %s14, 0
      %p58 = por %p56, %p57
      %p59 = scmp.ne.s32.totalorder %s45, %s46
      %p60 = scmp.eq.s32.totalorder %s15, 15
      %p61 = por %p59, %p60
      %p63 = scmp.ne.s32.totalorder %s46, %s62
      %p64 = scmp.eq.s32.totalorder %s15, 0
      %p65 = por %p63, %p64
      %s66 = ssub.s32 %s17, %s31
      %p67 = scmp.eq.s32.totalorder %s66, 0
      %s69 = sadd.s32 %s68, 1
      %s70 = scalar_select %p67, %s68, %s69
      %p73 = pneg %p67
      %p74 = scmp.eq.s32.totalorder %s9, 15
      %p75 = por %p73, %p74
      %p76 = scmp.ne.s32.totalorder %s68, %s71
      %p77 = scmp.eq.s32.totalorder %s9, 0
      %p78 = por %p76, %p77
      %p79 = scmp.ne.s32.totalorder %s68, %s71
      %p80 = scmp.eq.s32.totalorder %s14, 15
      %p81 = por %p79, %p80
      %p82 = scmp.ne.s32.totalorder %s71, %s72
      %p83 = scmp.eq.s32.totalorder %s14, 0
      %p84 = por %p82, %p83
      %p85 = scmp.ne.s32.totalorder %s71, %s72
      %p86 = scmp.eq.s32.totalorder %s15, 15
      %p87 = por %p85, %p86
      %p89 = scmp.ne.s32.totalorder %s72, %s88
      %p90 = scmp.eq.s32.totalorder %s15, 0
      %p91 = por %p89, %p90
      %s92 = ssub.s32 %s17, %s31
      %p93 = scmp.eq.s32.totalorder %s92, 0
      %s95 = sadd.s32 %s94, 1
      %s96 = scalar_select %p93, %s94, %s95
      %p99 = pneg %p93
      %p100 = scmp.eq.s32.totalorder %s9, 15
      %p101 = por %p99, %p100
      %p102 = scmp.ne.s32.totalorder %s94, %s97
      %p103 = scmp.eq.s32.totalorder %s9, 0
      %p104 = por %p102, %p103
      %p105 = scmp.ne.s32.totalorder %s94, %s97
      %p106 = scmp.eq.s32.totalorder %s14, 15
      %p107 = por %p105, %p106
      %p108 = scmp.ne.s32.totalorder %s97, %s98
      %p109 = scmp.eq.s32.totalorder %s14, 0
      %p110 = por %p108, %p109
      %p111 = scmp.ne.s32.totalorder %s97, %s98
      %p112 = scmp.eq.s32.totalorder %s15, 15
      %p113 = por %p111, %p112
      %p115 = scmp.ne.s32.totalorder %s98, %s114
      %p116 = scmp.eq.s32.totalorder %s15, 0
      %p117 = por %p115, %p116
      %s118 = ssub.s32 %s16, %s35
      %s119 = ssub.s32 %s17, %s31
      %s120 = sor.u32 %s118, %s119
      %s121 = ssub.s32 %s18, %s27
      %s122 = sor.u32 %s120, %s121
      %p123 = scmp.eq.s32.totalorder %s122, 0
      %s125 = sadd.s32 %s124, 1
      %s126 = scalar_select %p123, %s124, %s125
      %p129 = pneg %p123
      %p130 = scmp.eq.s32.totalorder %s9, 15
      %p131 = por %p129, %p130
      %p132 = scmp.ne.s32.totalorder %s124, %s127
      %p133 = scmp.eq.s32.totalorder %s9, 0
      %p134 = por %p132, %p133
      %p135 = scmp.ne.s32.totalorder %s124, %s127
      %p136 = scmp.eq.s32.totalorder %s14, 15
      %p137 = por %p135, %p136
      %p138 = scmp.ne.s32.totalorder %s127, %s128
      %p139 = scmp.eq.s32.totalorder %s14, 0
      %p140 = por %p138, %p139
      %p141 = scmp.ne.s32.totalorder %s127, %s128
      %p142 = scmp.eq.s32.totalorder %s15, 15
      %p143 = por %p141, %p142
      %p145 = scmp.ne.s32.totalorder %s128, %s144
      %p146 = scmp.eq.s32.totalorder %s15, 0
      %p147 = por %p145, %p146
      %p148 = scmp.le.s32.totalorder 1, %s9
      %p149 = scmp.lt.s32.totalorder %s9, 17
      %p150 = pnand %p148, %p149
      %p151 = pneg %p150
      // Predicated region
      $region9: #{batchnorm2d.3} parent=5 // pred_check
        _
      $region10: #{batchnorm2d.3} parent=5 // pred_check_branch
        %153 = sbr.rel (%p150) target = $region12
      $region11: #{batchnorm2d.3} parent=5 // pred_region
        %s154 = ssub.s32 %s9, 1
      $region12: #{batchnorm2d.3} parent=5 // pred_fallthru
        _
      %p155 = scmp.lt.s32.totalorder %s9, 16
      // Predicated region
      $region13: #{batchnorm2d.3} parent=5 // pred_check
        %p156 = pneg %p155
      $region14: #{batchnorm2d.3} parent=5 // pred_check_branch
        %158 = sbr.rel (%p156) target = $region16
      $region15: #{batchnorm2d.3} parent=5 // pred_region
        // Predicated region
        $region17: #{batchnorm2d.3} parent=15 // pred_check
          %p159 = pneg %p52
        $region18: #{batchnorm2d.3} parent=15 // pred_check_branch
          %161 = sbr.rel (%p159) target = $region20
        $region19: #{batchnorm2d.3} parent=15 // pred_region
          %s162 = sand.u32 %s42, 1
          %s163 = sand.u32 %s42, 1
          %s164 = smul.addr %s163, 128
          %s165 = scalar_lea.vmem [#allocation2], %s164
          %s166 = smul.u32 16, %s17
          %s167 = ssub.s32 124, %s166
          %p168 = scmp.lt.s32.totalorder %s167, 16
          %s169 = scalar_select %p168, %s167, 16
          %s170 = smul.u32 128, %s169
          %p171 = scmp.ne.s32.totalorder 0, %s170
          %s172 = smul.addr %s166, 2
          %s173 = sadd.s32 %s18, %s172
          %s174 = smul.addr %s16, 248
          %s175 = sadd.s32 %s173, %s174
          %s176 = smul.addr %s175, 8
          %s177 = scalar_lea.vmem %s0, %s176
          // Predicated region
          $region21: #{batchnorm2d.3} parent=19 // pred_check
            %p178 = pneg %p171
          $region22: #{batchnorm2d.3} parent=19 // pred_check_branch
            %180 = sbr.rel (%p178) target = $region24
          $region23: #{batchnorm2d.3} parent=19 // pred_region
            // Predicated region
            $region25: #{batchnorm2d.3} parent=23 // pred_check
              _
            $region26: #{batchnorm2d.3} parent=23 // pred_check_branch
              %182 = sbr.rel (0) target = $region28
            $region27: #{batchnorm2d.3} parent=23 // pred_region
              // Predicated region
              $region47: #{batchnorm2d.3} parent=27 // pred_check
                _
              $region48: #{batchnorm2d.3} parent=27 // pred_check_branch
                %261 = sbr.rel (0) target = $region50
              $region49: #{batchnorm2d.3} parent=27 // pred_region
                %s262 = sshrl.u32 %s169, 4
                // While loop
                $region51: #{batchnorm2d.3} parent=49 // loop_pre_header
                  _
                $region52: #{batchnorm2d.3} parent=49 // loop_header
                  %s264 = sphi 0, %s266
                  %p265 = scmp.ge.s32.totalorder %s264, %s262
                  %s269 = sphi 0, %s306
                  %s270 = sphi %s177, %s309
                  %s271 = sphi %s165, %s310
                $region53: #{batchnorm2d.3} parent=49 // loop_header_branch
                  %268 = sbr.rel (%p265) target = $region57
                $region54: #{batchnorm2d.3} parent=49 // loop_body
                  %v272 = vld [vmem:[%s270] sm:$0xff]
                  %273 = vst [vmem:[%s271] sm:$0xff] %v272
                  %v274 = vld [vmem:[%s270 + $0x10] sm:$0xff]
                  %275 = vst [vmem:[%s271 + $0x8] sm:$0xff] %v274
                  %v276 = vld [vmem:[%s270 + $0x20] sm:$0xff]
                  %277 = vst [vmem:[%s271 + $0x10] sm:$0xff] %v276
                  %v278 = vld [vmem:[%s270 + $0x30] sm:$0xff]
                  %279 = vst [vmem:[%s271 + $0x18] sm:$0xff] %v278
                  %v280 = vld [vmem:[%s270 + $0x40] sm:$0xff]
                  %281 = vst [vmem:[%s271 + $0x20] sm:$0xff] %v280
                  %v282 = vld [vmem:[%s270 + $0x50] sm:$0xff]
                  %283 = vst [vmem:[%s271 + $0x28] sm:$0xff] %v282
                  %v284 = vld [vmem:[%s270 + $0x60] sm:$0xff]
                  %285 = vst [vmem:[%s271 + $0x30] sm:$0xff] %v284
                  %v286 = vld [vmem:[%s270 + $0x70] sm:$0xff]
                  %287 = vst [vmem:[%s271 + $0x38] sm:$0xff] %v286
                  %v288 = vld [vmem:[%s270 + $0x80] sm:$0xff]
                  %289 = vst [vmem:[%s271 + $0x40] sm:$0xff] %v288
                  %v290 = vld [vmem:[%s270 + $0x90] sm:$0xff]
                  %291 = vst [vmem:[%s271 + $0x48] sm:$0xff] %v290
                  %v292 = vld [vmem:[%s270 + $0xa0] sm:$0xff]
                  %293 = vst [vmem:[%s271 + $0x50] sm:$0xff] %v292
                  %v294 = vld [vmem:[%s270 + $0xb0] sm:$0xff]
                  %295 = vst [vmem:[%s271 + $0x58] sm:$0xff] %v294
                  %v296 = vld [vmem:[%s270 + $0xc0] sm:$0xff]
                  %297 = vst [vmem:[%s271 + $0x60] sm:$0xff] %v296
                  %v298 = vld [vmem:[%s270 + $0xd0] sm:$0xff]
                  %299 = vst [vmem:[%s271 + $0x68] sm:$0xff] %v298
                  %v300 = vld [vmem:[%s270 + $0xe0] sm:$0xff]
                  %301 = vst [vmem:[%s271 + $0x70] sm:$0xff] %v300
                  %v302 = vld [vmem:[%s270 + $0xf0] sm:$0xff]
                  %303 = vst [vmem:[%s271 + $0x78] sm:$0xff] %v302
                  %s304 = sadd.s32 1, %s269
                  %p305 = scmp.ge.s32.totalorder %s304, %s262
                  %s306 = scalar_select %p305, 0, %s304
                  %s307 = smul.u32 %s306, 256
                  %s308 = smul.u32 %s306, 128
                  %s309 = scalar_lea.vmem %s177, %s307
                  %s310 = scalar_lea.vmem %s165, %s308 [#allocation2]
                $region55: #{batchnorm2d.3} parent=49 // loop_footer
                  %s266 = sadd.s32 %s264, 1
                $region56: #{batchnorm2d.3} parent=49 // loop_footer_branch
                  %263 = sbr.rel target = $region52
                $region57: #{batchnorm2d.3} parent=49 // loop_exit
                  _
                %s311 = sshrl.u32 %s169, 4
                %s312 = sand.u32 %s169, 15
                %s313 = smul.u32 %s311, 16
                %s314 = smul.u32 16, %s313
                %s315 = scalar_lea.vmem %s177, %s314
                %s316 = smul.u32 8, %s313
                %s317 = scalar_lea.vmem %s165, %s316 [#allocation2]
                // While loop
                $region58: #{batchnorm2d.3} parent=49 // loop_pre_header
                  _
                $region59: #{batchnorm2d.3} parent=49 // loop_header
                  %s319 = sphi 0, %s321
                  %p320 = scmp.ge.s32.totalorder %s319, %s312
                  %s324 = sphi 0, %s331
                  %s325 = sphi %s315, %s334
                  %s326 = sphi %s317, %s335
                $region60: #{batchnorm2d.3} parent=49 // loop_header_branch
                  %323 = sbr.rel (%p320) target = $region64
                $region61: #{batchnorm2d.3} parent=49 // loop_body
                  %v327 = vld [vmem:[%s325] sm:$0xff]
                  %328 = vst [vmem:[%s326] sm:$0xff] %v327
                  %s329 = sadd.s32 1, %s324
                  %p330 = scmp.ge.s32.totalorder %s329, %s312
                  %s331 = scalar_select %p330, 0, %s329
                  %s332 = smul.u32 %s331, 16
                  %s333 = smul.u32 %s331, 8
                  %s334 = scalar_lea.vmem %s315, %s332
                  %s335 = scalar_lea.vmem %s317, %s333 [#allocation2]
                $region62: #{batchnorm2d.3} parent=49 // loop_footer
                  %s321 = sadd.s32 %s319, 1
                $region63: #{batchnorm2d.3} parent=49 // loop_footer_branch
                  %318 = sbr.rel target = $region59
                $region64: #{batchnorm2d.3} parent=49 // loop_exit
                  _
              $region50: #{batchnorm2d.3} parent=27 // pred_fallthru
                _
              // Predicated region
              $region65: #{batchnorm2d.3} parent=27 // pred_check
                _
              $region66: #{batchnorm2d.3} parent=27 // pred_check_branch
                %337 = sbr.rel target = $region68
              $region67: #{batchnorm2d.3} parent=27 // pred_region
                _
              $region68: #{batchnorm2d.3} parent=27 // pred_fallthru
                _
            $region28: #{batchnorm2d.3} parent=23 // pred_fallthru
              _
            // Predicated region
            $region29: #{batchnorm2d.3} parent=23 // pred_check
              _
            $region30: #{batchnorm2d.3} parent=23 // pred_check_branch
              %184 = sbr.rel target = $region32
            $region31: #{batchnorm2d.3} parent=23 // pred_region
              %s186 = sshrl.u32 %s169, 4
              // While loop
              $region33: #{batchnorm2d.3} parent=31 // loop_pre_header
                _
              $region34: #{batchnorm2d.3} parent=31 // loop_header
                %s188 = sphi 0, %s190
                %p189 = scmp.ge.s32.totalorder %s188, %s186
                %s193 = sphi 0, %s230
                %s194 = sphi %s177, %s233
                %s195 = sphi %s165, %s234
              $region35: #{batchnorm2d.3} parent=31 // loop_header_branch
                %192 = sbr.rel (%p189) target = $region39
              $region36: #{batchnorm2d.3} parent=31 // loop_body
                %v196 = vld [vmem:[%s194] sm:$0xff]
                %197 = vst [vmem:[%s195] sm:$0xff] %v196
                %v198 = vld [vmem:[%s194 + $0x10] sm:$0xff]
                %199 = vst [vmem:[%s195 + $0x8] sm:$0xff] %v198
                %v200 = vld [vmem:[%s194 + $0x20] sm:$0xff]
                %201 = vst [vmem:[%s195 + $0x10] sm:$0xff] %v200
                %v202 = vld [vmem:[%s194 + $0x30] sm:$0xff]
                %203 = vst [vmem:[%s195 + $0x18] sm:$0xff] %v202
                %v204 = vld [vmem:[%s194 + $0x40] sm:$0xff]
                %205 = vst [vmem:[%s195 + $0x20] sm:$0xff] %v204
                %v206 = vld [vmem:[%s194 + $0x50] sm:$0xff]
                %207 = vst [vmem:[%s195 + $0x28] sm:$0xff] %v206
                %v208 = vld [vmem:[%s194 + $0x60] sm:$0xff]
                %209 = vst [vmem:[%s195 + $0x30] sm:$0xff] %v208
                %v210 = vld [vmem:[%s194 + $0x70] sm:$0xff]
                %211 = vst [vmem:[%s195 + $0x38] sm:$0xff] %v210
                %v212 = vld [vmem:[%s194 + $0x80] sm:$0xff]
                %213 = vst [vmem:[%s195 + $0x40] sm:$0xff] %v212
                %v214 = vld [vmem:[%s194 + $0x90] sm:$0xff]
                %215 = vst [vmem:[%s195 + $0x48] sm:$0xff] %v214
                %v216 = vld [vmem:[%s194 + $0xa0] sm:$0xff]
                %217 = vst [vmem:[%s195 + $0x50] sm:$0xff] %v216
                %v218 = vld [vmem:[%s194 + $0xb0] sm:$0xff]
                %219 = vst [vmem:[%s195 + $0x58] sm:$0xff] %v218
                %v220 = vld [vmem:[%s194 + $0xc0] sm:$0xff]
                %221 = vst [vmem:[%s195 + $0x60] sm:$0xff] %v220
                %v222 = vld [vmem:[%s194 + $0xd0] sm:$0xff]
                %223 = vst [vmem:[%s195 + $0x68] sm:$0xff] %v222
                %v224 = vld [vmem:[%s194 + $0xe0] sm:$0xff]
                %225 = vst [vmem:[%s195 + $0x70] sm:$0xff] %v224
                %v226 = vld [vmem:[%s194 + $0xf0] sm:$0xff]
                %227 = vst [vmem:[%s195 + $0x78] sm:$0xff] %v226
                %s228 = sadd.s32 1, %s193
                %p229 = scmp.ge.s32.totalorder %s228, %s186
                %s230 = scalar_select %p229, 0, %s228
                %s231 = smul.u32 %s230, 256
                %s232 = smul.u32 %s230, 128
                %s233 = scalar_lea.vmem %s177, %s231
                %s234 = scalar_lea.vmem %s165, %s232 [#allocation2]
              $region37: #{batchnorm2d.3} parent=31 // loop_footer
                %s190 = sadd.s32 %s188, 1
              $region38: #{batchnorm2d.3} parent=31 // loop_footer_branch
                %187 = sbr.rel target = $region34
              $region39: #{batchnorm2d.3} parent=31 // loop_exit
                _
              %s235 = sshrl.u32 %s169, 4
              %s236 = sand.u32 %s169, 15
              %s237 = smul.u32 %s235, 16
              %s238 = smul.u32 16, %s237
              %s239 = scalar_lea.vmem %s177, %s238
              %s240 = smul.u32 8, %s237
              %s241 = scalar_lea.vmem %s165, %s240 [#allocation2]
              // While loop
              $region40: #{batchnorm2d.3} parent=31 // loop_pre_header
                _
              $region41: #{batchnorm2d.3} parent=31 // loop_header
                %s243 = sphi 0, %s245
                %p244 = scmp.ge.s32.totalorder %s243, %s236
                %s248 = sphi 0, %s255
                %s249 = sphi %s239, %s258
                %s250 = sphi %s241, %s259
              $region42: #{batchnorm2d.3} parent=31 // loop_header_branch
                %247 = sbr.rel (%p244) target = $region46
              $region43: #{batchnorm2d.3} parent=31 // loop_body
                %v251 = vld [vmem:[%s249] sm:$0xff]
                %252 = vst [vmem:[%s250] sm:$0xff] %v251
                %s253 = sadd.s32 1, %s248
                %p254 = scmp.ge.s32.totalorder %s253, %s236
                %s255 = scalar_select %p254, 0, %s253
                %s256 = smul.u32 %s255, 16
                %s257 = smul.u32 %s255, 8
                %s258 = scalar_lea.vmem %s239, %s256
                %s259 = scalar_lea.vmem %s241, %s257 [#allocation2]
              $region44: #{batchnorm2d.3} parent=31 // loop_footer
                %s245 = sadd.s32 %s243, 1
              $region45: #{batchnorm2d.3} parent=31 // loop_footer_branch
                %242 = sbr.rel target = $region41
              $region46: #{batchnorm2d.3} parent=31 // loop_exit
                _
            $region32: #{batchnorm2d.3} parent=23 // pred_fallthru
              _
          $region24: #{batchnorm2d.3} parent=19 // pred_fallthru
            _
          %338 = vnop
        $region20: #{batchnorm2d.3} parent=15 // pred_fallthru
          _
        // Predicated region
        $region69: #{batchnorm2d.3} parent=15 // pred_check
          %p339 = pneg %p78
        $region70: #{batchnorm2d.3} parent=15 // pred_check_branch
          %341 = sbr.rel (%p339) target = $region72
        $region71: #{batchnorm2d.3} parent=15 // pred_region
          %s342 = smul.u32 16, %s17
          %s343 = ssub.s32 124, %s342
          %p344 = scmp.lt.s32.totalorder %s343, 16
          %s345 = scalar_select %p344, %s343, 16
          %s346 = smul.u32 128, %s345
          %p347 = scmp.lt.s32.totalorder %s342, 123
          %s348 = scalar_select %p347, %s342, 123
          %s349 = smul.addr %s348, 8
          %s350 = scalar_lea.vmem %s1, %s349
          %s351 = smul.u32 16, %s17
          %s352 = ssub.s32 124, %s351
          %p353 = scmp.lt.s32.totalorder %s352, 16
          %s354 = scalar_select %p353, %s352, 16
          %s355 = smul.u32 128, %s354
        $region72: #{batchnorm2d.3} parent=15 // pred_fallthru
          _
        // Predicated region
        $region73: #{batchnorm2d.3} parent=15 // pred_check
          %p356 = pneg %p104
        $region74: #{batchnorm2d.3} parent=15 // pred_check_branch
          %358 = sbr.rel (%p356) target = $region76
        $region75: #{batchnorm2d.3} parent=15 // pred_region
          %s359 = smul.u32 16, %s17
          %s360 = ssub.s32 124, %s359
          %p361 = scmp.lt.s32.totalorder %s360, 16
          %s362 = scalar_select %p361, %s360, 16
          %s363 = smul.u32 128, %s362
          %p364 = scmp.lt.s32.totalorder %s359, 123
          %s365 = scalar_select %p364, %s359, 123
          %s366 = smul.addr %s365, 8
          %s367 = scalar_lea.vmem %s2, %s366
          %s368 = smul.u32 16, %s17
          %s369 = ssub.s32 124, %s368
          %p370 = scmp.lt.s32.totalorder %s369, 16
          %s371 = scalar_select %p370, %s369, 16
          %s372 = smul.u32 128, %s371
        $region76: #{batchnorm2d.3} parent=15 // pred_fallthru
          _
      $region16: #{batchnorm2d.3} parent=5 // pred_fallthru
        _
      %p373 = scmp.le.s32.totalorder 1, %s9
      %p374 = scmp.lt.s32.totalorder %s9, 17
      %p375 = pnand %p373, %p374
      %p376 = pneg %p375
      // Predicated region
      $region77: #{batchnorm2d.3} parent=5 // pred_check
        _
      $region78: #{batchnorm2d.3} parent=5 // pred_check_branch
        %378 = sbr.rel (%p375) target = $region80
      $region79: #{batchnorm2d.3} parent=5 // pred_region
        %s379 = ssub.s32 %s9, 1
        %s380 = sand.u32 %s45, 1
        %s381 = sand.u32 %s45, 1
        %s382 = smul.addr %s381, 128
        %s383 = scalar_lea.vmem [#allocation2], %s382
        // Predicated region
        $region81: #{batchnorm2d.3} parent=79 // pred_check
          %p384 = pneg %p58
        $region82: #{batchnorm2d.3} parent=79 // pred_check_branch
          %386 = sbr.rel (%p384) target = $region84
        $region83: #{batchnorm2d.3} parent=79 // pred_region
          _
        $region84: #{batchnorm2d.3} parent=79 // pred_fallthru
          _
        %s387 = sand.u32 %s45, 1
        %s388 = sand.u32 %s45, 1
        %s389 = smul.addr %s388, 128
        %s390 = scalar_lea.vmem [#allocation2], %s389
        %p391 = pneg %p58
        %p392 = pneg %p55
        %s393 = smul.u32 16, %s20
        %s394 = ssub.s32 124, %s393
        %p395 = scmp.lt.s32.totalorder %s394, 16
        %s396 = scalar_select %p395, %s394, 16
        %s397 = smul.u32 128, %s396
        %p398 = scmp.lt.s32.totalorder %s393, 123
        %s399 = scalar_select %p398, %s393, 123
        %s400 = smul.addr %s399, 8
        %s401 = scalar_lea.vmem %s1, %s400
        %p402 = pneg %p84
        %p403 = pneg %p81
        %s404 = smul.u32 16, %s20
        %s405 = ssub.s32 124, %s404
        %p406 = scmp.lt.s32.totalorder %s405, 16
        %s407 = scalar_select %p406, %s405, 16
        %s408 = smul.u32 128, %s407
        %p409 = scmp.lt.s32.totalorder %s404, 123
        %s410 = scalar_select %p409, %s404, 123
        %s411 = smul.addr %s410, 8
        %s412 = scalar_lea.vmem %s2, %s411
        %p413 = pneg %p110
        %p414 = pneg %p107
        %p415 = pneg %p140
        %p416 = pneg %p137
        %s417 = sand.u32 %s127, 1
        %s418 = sand.u32 %s127, 1
        %s419 = smul.addr %s418, 128
        %s420 = scalar_lea.vmem [#allocation3], %s419
        %s421 = smul.u32 16, %s20
        %s422 = ssub.s32 124, %s421
        %p423 = scmp.lt.s32.totalorder %s422, 16
        %s424 = scalar_select %p423, %s422, 16
        %s425 = smul.u32 128, %s424
        %s426 = smul.u32 16, %s20
        %s427 = ssub.s32 124, %s426
        %p428 = scmp.lt.s32.totalorder %s427, 16
        %s429 = scalar_select %p428, %s427, 16
        %s430 = smul.u32 128, %s429
        %p431 = scmp.lt.s32.totalorder %s426, 123
        %s432 = scalar_select %p431, %s426, 123
        %s433 = smul.addr %s432, 8
        %s434 = scalar_lea.vmem %s1, %s433
        %s435 = smul.u32 16, %s20
        %s436 = ssub.s32 124, %s435
        %p437 = scmp.lt.s32.totalorder %s436, 16
        %s438 = scalar_select %p437, %s436, 16
        %s439 = smul.u32 128, %s438
        %s440 = smul.u32 16, %s20
        %s441 = ssub.s32 124, %s440
        %p442 = scmp.lt.s32.totalorder %s441, 16
        %s443 = scalar_select %p442, %s441, 16
        %s444 = smul.u32 128, %s443
        %p445 = scmp.lt.s32.totalorder %s440, 123
        %s446 = scalar_select %p445, %s440, 123
        %s447 = smul.addr %s446, 8
        %s448 = scalar_lea.vmem %s2, %s447
        %s449 = smul.u32 16, %s20
        %s450 = ssub.s32 124, %s449
        %p451 = scmp.lt.s32.totalorder %s450, 16
        %s452 = scalar_select %p451, %s450, 16
        %s453 = smul.u32 128, %s452
        %s454 = smul.u32 16, %s20
        %s455 = ssub.s32 124, %s454
        %p456 = scmp.lt.s32.totalorder %s455, 16
        %s457 = scalar_select %p456, %s455, 16
        %s458 = smul.u32 128, %s457
        %v459 = vld [vmem:[%s383] sm:$0xff]
        %v460 = vld [vmem:[%s383 + $0x8] sm:$0xff]
        %v461 = vld [vmem:[%s383 + $0x10] sm:$0xff]
        %v462 = vld [vmem:[%s383 + $0x18] sm:$0xff]
        %v463 = vld [vmem:[%s383 + $0x20] sm:$0xff]
        %v464 = vld [vmem:[%s383 + $0x28] sm:$0xff]
        %v465 = vld [vmem:[%s383 + $0x30] sm:$0xff]
        %v466 = vld [vmem:[%s383 + $0x38] sm:$0xff]
        %v467 = vld [vmem:[%s383 + $0x40] sm:$0xff]
        %v468 = vld [vmem:[%s383 + $0x48] sm:$0xff]
        %v469 = vld [vmem:[%s383 + $0x50] sm:$0xff]
        %v470 = vld [vmem:[%s383 + $0x58] sm:$0xff]
        %v471 = vld [vmem:[%s383 + $0x60] sm:$0xff]
        %v472 = vld [vmem:[%s383 + $0x68] sm:$0xff]
        %v473 = vld [vmem:[%s383 + $0x70] sm:$0xff]
        %v474 = vld [vmem:[%s383 + $0x78] sm:$0xff]
        %v475 = vld [vmem:[%s434] sm:$0xff]
        %v476 = vld [vmem:[%s434 + $0x8] sm:$0xff]
        %v477 = vld [vmem:[%s434 + $0x10] sm:$0xff]
        %v478 = vld [vmem:[%s434 + $0x18] sm:$0xff]
        %v479 = vld [vmem:[%s434 + $0x20] sm:$0xff]
        %v480 = vld [vmem:[%s434 + $0x28] sm:$0xff]
        %v481 = vld [vmem:[%s434 + $0x30] sm:$0xff]
        %v482 = vld [vmem:[%s434 + $0x38] sm:$0xff]
        %v483 = vld [vmem:[%s434 + $0x40] sm:$0xff]
        %v484 = vld [vmem:[%s434 + $0x48] sm:$0xff]
        %v485 = vld [vmem:[%s434 + $0x50] sm:$0xff]
        %v486 = vld [vmem:[%s434 + $0x58] sm:$0xff]
        %v487 = vld [vmem:[%s434 + $0x60] sm:$0xff]
        %v488 = vld [vmem:[%s434 + $0x68] sm:$0xff]
        %v489 = vld [vmem:[%s434 + $0x70] sm:$0xff]
        %v490 = vld [vmem:[%s434 + $0x78] sm:$0xff]
        %492 = vset.pattern.permute.xlu0 0
        %493 = vperm.xlu0 %492, %v475
        %v494 = vpop.permute.xlu0 %493
        %497 = vset.pattern.permute.xlu0 0
        %498 = vperm.xlu0 %497, %v476
        %v499 = vpop.permute.xlu0 %498
        %502 = vset.pattern.permute.xlu0 0
        %503 = vperm.xlu0 %502, %v477
        %v504 = vpop.permute.xlu0 %503
        %507 = vset.pattern.permute.xlu0 0
        %508 = vperm.xlu0 %507, %v478
        %v509 = vpop.permute.xlu0 %508
        %512 = vset.pattern.permute.xlu0 0
        %513 = vperm.xlu0 %512, %v479
        %v514 = vpop.permute.xlu0 %513
        %517 = vset.pattern.permute.xlu0 0
        %518 = vperm.xlu0 %517, %v480
        %v519 = vpop.permute.xlu0 %518
        %522 = vset.pattern.permute.xlu0 0
        %523 = vperm.xlu0 %522, %v481
        %v524 = vpop.permute.xlu0 %523
        %527 = vset.pattern.permute.xlu0 0
        %528 = vperm.xlu0 %527, %v482
        %v529 = vpop.permute.xlu0 %528
        %532 = vset.pattern.permute.xlu0 0
        %533 = vperm.xlu0 %532, %v483
        %v534 = vpop.permute.xlu0 %533
        %537 = vset.pattern.permute.xlu0 0
        %538 = vperm.xlu0 %537, %v484
        %v539 = vpop.permute.xlu0 %538
        %542 = vset.pattern.permute.xlu0 0
        %543 = vperm.xlu0 %542, %v485
        %v544 = vpop.permute.xlu0 %543
        %547 = vset.pattern.permute.xlu0 0
        %548 = vperm.xlu0 %547, %v486
        %v549 = vpop.permute.xlu0 %548
        %552 = vset.pattern.permute.xlu0 0
        %553 = vperm.xlu0 %552, %v487
        %v554 = vpop.permute.xlu0 %553
        %557 = vset.pattern.permute.xlu0 0
        %558 = vperm.xlu0 %557, %v488
        %v559 = vpop.permute.xlu0 %558
        %562 = vset.pattern.permute.xlu0 0
        %563 = vperm.xlu0 %562, %v489
        %v564 = vpop.permute.xlu0 %563
        %567 = vset.pattern.permute.xlu0 0
        %568 = vperm.xlu0 %567, %v490
        %v569 = vpop.permute.xlu0 %568
        %v571 = vmul.f32 %v459, %v494
        %v572 = vmul.f32 %v460, %v499
        %v573 = vmul.f32 %v461, %v504
        %v574 = vmul.f32 %v462, %v509
        %v575 = vmul.f32 %v463, %v514
        %v576 = vmul.f32 %v464, %v519
        %v577 = vmul.f32 %v465, %v524
        %v578 = vmul.f32 %v466, %v529
        %v579 = vmul.f32 %v467, %v534
        %v580 = vmul.f32 %v468, %v539
        %v581 = vmul.f32 %v469, %v544
        %v582 = vmul.f32 %v470, %v549
        %v583 = vmul.f32 %v471, %v554
        %v584 = vmul.f32 %v472, %v559
        %v585 = vmul.f32 %v473, %v564
        %v586 = vmul.f32 %v474, %v569
        %v587 = vld [vmem:[%s448] sm:$0xff]
        %v588 = vld [vmem:[%s448 + $0x8] sm:$0xff]
        %v589 = vld [vmem:[%s448 + $0x10] sm:$0xff]
        %v590 = vld [vmem:[%s448 + $0x18] sm:$0xff]
        %v591 = vld [vmem:[%s448 + $0x20] sm:$0xff]
        %v592 = vld [vmem:[%s448 + $0x28] sm:$0xff]
        %v593 = vld [vmem:[%s448 + $0x30] sm:$0xff]
        %v594 = vld [vmem:[%s448 + $0x38] sm:$0xff]
        %v595 = vld [vmem:[%s448 + $0x40] sm:$0xff]
        %v596 = vld [vmem:[%s448 + $0x48] sm:$0xff]
        %v597 = vld [vmem:[%s448 + $0x50] sm:$0xff]
        %v598 = vld [vmem:[%s448 + $0x58] sm:$0xff]
        %v599 = vld [vmem:[%s448 + $0x60] sm:$0xff]
        %v600 = vld [vmem:[%s448 + $0x68] sm:$0xff]
        %v601 = vld [vmem:[%s448 + $0x70] sm:$0xff]
        %v602 = vld [vmem:[%s448 + $0x78] sm:$0xff]
        %604 = vset.pattern.permute.xlu0 0
        %605 = vperm.xlu0 %604, %v587
        %v606 = vpop.permute.xlu0 %605
        %609 = vset.pattern.permute.xlu0 0
        %610 = vperm.xlu0 %609, %v588
        %v611 = vpop.permute.xlu0 %610
        %614 = vset.pattern.permute.xlu0 0
        %615 = vperm.xlu0 %614, %v589
        %v616 = vpop.permute.xlu0 %615
        %619 = vset.pattern.permute.xlu0 0
        %620 = vperm.xlu0 %619, %v590
        %v621 = vpop.permute.xlu0 %620
        %624 = vset.pattern.permute.xlu0 0
        %625 = vperm.xlu0 %624, %v591
        %v626 = vpop.permute.xlu0 %625
        %629 = vset.pattern.permute.xlu0 0
        %630 = vperm.xlu0 %629, %v592
        %v631 = vpop.permute.xlu0 %630
        %634 = vset.pattern.permute.xlu0 0
        %635 = vperm.xlu0 %634, %v593
        %v636 = vpop.permute.xlu0 %635
        %639 = vset.pattern.permute.xlu0 0
        %640 = vperm.xlu0 %639, %v594
        %v641 = vpop.permute.xlu0 %640
        %644 = vset.pattern.permute.xlu0 0
        %645 = vperm.xlu0 %644, %v595
        %v646 = vpop.permute.xlu0 %645
        %649 = vset.pattern.permute.xlu0 0
        %650 = vperm.xlu0 %649, %v596
        %v651 = vpop.permute.xlu0 %650
        %654 = vset.pattern.permute.xlu0 0
        %655 = vperm.xlu0 %654, %v597
        %v656 = vpop.permute.xlu0 %655
        %659 = vset.pattern.permute.xlu0 0
        %660 = vperm.xlu0 %659, %v598
        %v661 = vpop.permute.xlu0 %660
        %664 = vset.pattern.permute.xlu0 0
        %665 = vperm.xlu0 %664, %v599
        %v666 = vpop.permute.xlu0 %665
        %669 = vset.pattern.permute.xlu0 0
        %670 = vperm.xlu0 %669, %v600
        %v671 = vpop.permute.xlu0 %670
        %674 = vset.pattern.permute.xlu0 0
        %675 = vperm.xlu0 %674, %v601
        %v676 = vpop.permute.xlu0 %675
        %679 = vset.pattern.permute.xlu0 0
        %680 = vperm.xlu0 %679, %v602
        %v681 = vpop.permute.xlu0 %680
        %v683 = vadd.f32 %v571, %v606
        %v684 = vadd.f32 %v572, %v611
        %v685 = vadd.f32 %v573, %v616
        %v686 = vadd.f32 %v574, %v621
        %v687 = vadd.f32 %v575, %v626
        %v688 = vadd.f32 %v576, %v631
        %v689 = vadd.f32 %v577, %v636
        %v690 = vadd.f32 %v578, %v641
        %v691 = vadd.f32 %v579, %v646
        %v692 = vadd.f32 %v580, %v651
        %v693 = vadd.f32 %v581, %v656
        %v694 = vadd.f32 %v582, %v661
        %v695 = vadd.f32 %v583, %v666
        %v696 = vadd.f32 %v584, %v671
        %v697 = vadd.f32 %v585, %v676
        %v698 = vadd.f32 %v586, %v681
        %699 = vst [vmem:[%s420] sm:$0xff] %v683
        %700 = vst [vmem:[%s420 + $0x8] sm:$0xff] %v684
        %701 = vst [vmem:[%s420 + $0x10] sm:$0xff] %v685
        %702 = vst [vmem:[%s420 + $0x18] sm:$0xff] %v686
        %703 = vst [vmem:[%s420 + $0x20] sm:$0xff] %v687
        %704 = vst [vmem:[%s420 + $0x28] sm:$0xff] %v688
        %705 = vst [vmem:[%s420 + $0x30] sm:$0xff] %v689
        %706 = vst [vmem:[%s420 + $0x38] sm:$0xff] %v690
        %707 = vst [vmem:[%s420 + $0x40] sm:$0xff] %v691
        %708 = vst [vmem:[%s420 + $0x48] sm:$0xff] %v692
        %709 = vst [vmem:[%s420 + $0x50] sm:$0xff] %v693
        %710 = vst [vmem:[%s420 + $0x58] sm:$0xff] %v694
        %711 = vst [vmem:[%s420 + $0x60] sm:$0xff] %v695
        %712 = vst [vmem:[%s420 + $0x68] sm:$0xff] %v696
        %713 = vst [vmem:[%s420 + $0x70] sm:$0xff] %v697
        %714 = vst [vmem:[%s420 + $0x78] sm:$0xff] %v698
        %s715 = sand.u32 %s127, 1
        %s716 = sand.u32 %s127, 1
        %s717 = smul.addr %s716, 128
        %s718 = scalar_lea.vmem [#allocation3], %s717
        // Predicated region
        $region85: #{batchnorm2d.3} parent=79 // pred_check
          %p719 = pneg %p137
        $region86: #{batchnorm2d.3} parent=79 // pred_check_branch
          %721 = sbr.rel (%p719) target = $region88
        $region87: #{batchnorm2d.3} parent=79 // pred_region
          %s722 = smul.u32 16, %s20
          %s723 = ssub.s32 124, %s722
          %p724 = scmp.lt.s32.totalorder %s723, 16
          %s725 = scalar_select %p724, %s723, 16
          %s726 = smul.u32 128, %s725
          %p727 = scmp.ne.s32.totalorder 0, %s726
          %s728 = smul.addr %s722, 2
          %s729 = sadd.s32 %s21, %s728
          %s730 = smul.addr %s19, 248
          %s731 = sadd.s32 %s729, %s730
          %s732 = smul.addr %s731, 8
          %s733 = scalar_lea.vmem %s3, %s732
          // Predicated region
          $region89: #{batchnorm2d.3} parent=87 // pred_check
            %p734 = pneg %p727
          $region90: #{batchnorm2d.3} parent=87 // pred_check_branch
            %736 = sbr.rel (%p734) target = $region92
          $region91: #{batchnorm2d.3} parent=87 // pred_region
            // Predicated region
            $region93: #{batchnorm2d.3} parent=91 // pred_check
              _
            $region94: #{batchnorm2d.3} parent=91 // pred_check_branch
              %738 = sbr.rel (0) target = $region96
            $region95: #{batchnorm2d.3} parent=91 // pred_region
              // Predicated region
              $region115: #{batchnorm2d.3} parent=95 // pred_check
                _
              $region116: #{batchnorm2d.3} parent=95 // pred_check_branch
                %817 = sbr.rel (0) target = $region118
              $region117: #{batchnorm2d.3} parent=95 // pred_region
                %s818 = sshrl.u32 %s725, 4
                // While loop
                $region119: #{batchnorm2d.3} parent=117 // loop_pre_header
                  _
                $region120: #{batchnorm2d.3} parent=117 // loop_header
                  %s820 = sphi 0, %s822
                  %p821 = scmp.ge.s32.totalorder %s820, %s818
                  %s825 = sphi 0, %s862
                  %s826 = sphi %s718, %s865
                  %s827 = sphi %s733, %s866
                $region121: #{batchnorm2d.3} parent=117 // loop_header_branch
                  %824 = sbr.rel (%p821) target = $region125
                $region122: #{batchnorm2d.3} parent=117 // loop_body
                  %v828 = vld [vmem:[%s826] sm:$0xff]
                  %829 = vst [vmem:[%s827] sm:$0xff] %v828
                  %v830 = vld [vmem:[%s826 + $0x8] sm:$0xff]
                  %831 = vst [vmem:[%s827 + $0x10] sm:$0xff] %v830
                  %v832 = vld [vmem:[%s826 + $0x10] sm:$0xff]
                  %833 = vst [vmem:[%s827 + $0x20] sm:$0xff] %v832
                  %v834 = vld [vmem:[%s826 + $0x18] sm:$0xff]
                  %835 = vst [vmem:[%s827 + $0x30] sm:$0xff] %v834
                  %v836 = vld [vmem:[%s826 + $0x20] sm:$0xff]
                  %837 = vst [vmem:[%s827 + $0x40] sm:$0xff] %v836
                  %v838 = vld [vmem:[%s826 + $0x28] sm:$0xff]
                  %839 = vst [vmem:[%s827 + $0x50] sm:$0xff] %v838
                  %v840 = vld [vmem:[%s826 + $0x30] sm:$0xff]
                  %841 = vst [vmem:[%s827 + $0x60] sm:$0xff] %v840
                  %v842 = vld [vmem:[%s826 + $0x38] sm:$0xff]
                  %843 = vst [vmem:[%s827 + $0x70] sm:$0xff] %v842
                  %v844 = vld [vmem:[%s826 + $0x40] sm:$0xff]
                  %845 = vst [vmem:[%s827 + $0x80] sm:$0xff] %v844
                  %v846 = vld [vmem:[%s826 + $0x48] sm:$0xff]
                  %847 = vst [vmem:[%s827 + $0x90] sm:$0xff] %v846
                  %v848 = vld [vmem:[%s826 + $0x50] sm:$0xff]
                  %849 = vst [vmem:[%s827 + $0xa0] sm:$0xff] %v848
                  %v850 = vld [vmem:[%s826 + $0x58] sm:$0xff]
                  %851 = vst [vmem:[%s827 + $0xb0] sm:$0xff] %v850
                  %v852 = vld [vmem:[%s826 + $0x60] sm:$0xff]
                  %853 = vst [vmem:[%s827 + $0xc0] sm:$0xff] %v852
                  %v854 = vld [vmem:[%s826 + $0x68] sm:$0xff]
                  %855 = vst [vmem:[%s827 + $0xd0] sm:$0xff] %v854
                  %v856 = vld [vmem:[%s826 + $0x70] sm:$0xff]
                  %857 = vst [vmem:[%s827 + $0xe0] sm:$0xff] %v856
                  %v858 = vld [vmem:[%s826 + $0x78] sm:$0xff]
                  %859 = vst [vmem:[%s827 + $0xf0] sm:$0xff] %v858
                  %s860 = sadd.s32 1, %s825
                  %p861 = scmp.ge.s32.totalorder %s860, %s818
                  %s862 = scalar_select %p861, 0, %s860
                  %s863 = smul.u32 %s862, 128
                  %s864 = smul.u32 %s862, 256
                  %s865 = scalar_lea.vmem %s718, %s863 [#allocation3]
                  %s866 = scalar_lea.vmem %s733, %s864
                $region123: #{batchnorm2d.3} parent=117 // loop_footer
                  %s822 = sadd.s32 %s820, 1
                $region124: #{batchnorm2d.3} parent=117 // loop_footer_branch
                  %819 = sbr.rel target = $region120
                $region125: #{batchnorm2d.3} parent=117 // loop_exit
                  _
                %s867 = sshrl.u32 %s725, 4
                %s868 = sand.u32 %s725, 15
                %s869 = smul.u32 %s867, 16
                %s870 = smul.u32 8, %s869
                %s871 = scalar_lea.vmem %s718, %s870 [#allocation3]
                %s872 = smul.u32 16, %s869
                %s873 = scalar_lea.vmem %s733, %s872
                // While loop
                $region126: #{batchnorm2d.3} parent=117 // loop_pre_header
                  _
                $region127: #{batchnorm2d.3} parent=117 // loop_header
                  %s875 = sphi 0, %s877
                  %p876 = scmp.ge.s32.totalorder %s875, %s868
                  %s880 = sphi 0, %s887
                  %s881 = sphi %s871, %s890
                  %s882 = sphi %s873, %s891
                $region128: #{batchnorm2d.3} parent=117 // loop_header_branch
                  %879 = sbr.rel (%p876) target = $region132
                $region129: #{batchnorm2d.3} parent=117 // loop_body
                  %v883 = vld [vmem:[%s881] sm:$0xff]
                  %884 = vst [vmem:[%s882] sm:$0xff] %v883
                  %s885 = sadd.s32 1, %s880
                  %p886 = scmp.ge.s32.totalorder %s885, %s868
                  %s887 = scalar_select %p886, 0, %s885
                  %s888 = smul.u32 %s887, 8
                  %s889 = smul.u32 %s887, 16
                  %s890 = scalar_lea.vmem %s871, %s888 [#allocation3]
                  %s891 = scalar_lea.vmem %s873, %s889
                $region130: #{batchnorm2d.3} parent=117 // loop_footer
                  %s877 = sadd.s32 %s875, 1
                $region131: #{batchnorm2d.3} parent=117 // loop_footer_branch
                  %874 = sbr.rel target = $region127
                $region132: #{batchnorm2d.3} parent=117 // loop_exit
                  _
              $region118: #{batchnorm2d.3} parent=95 // pred_fallthru
                _
              // Predicated region
              $region133: #{batchnorm2d.3} parent=95 // pred_check
                _
              $region134: #{batchnorm2d.3} parent=95 // pred_check_branch
                %893 = sbr.rel target = $region136
              $region135: #{batchnorm2d.3} parent=95 // pred_region
                _
              $region136: #{batchnorm2d.3} parent=95 // pred_fallthru
                _
            $region96: #{batchnorm2d.3} parent=91 // pred_fallthru
              _
            // Predicated region
            $region97: #{batchnorm2d.3} parent=91 // pred_check
              _
            $region98: #{batchnorm2d.3} parent=91 // pred_check_branch
              %740 = sbr.rel target = $region100
            $region99: #{batchnorm2d.3} parent=91 // pred_region
              %s742 = sshrl.u32 %s725, 4
              // While loop
              $region101: #{batchnorm2d.3} parent=99 // loop_pre_header
                _
              $region102: #{batchnorm2d.3} parent=99 // loop_header
                %s744 = sphi 0, %s746
                %p745 = scmp.ge.s32.totalorder %s744, %s742
                %s749 = sphi 0, %s786
                %s750 = sphi %s718, %s789
                %s751 = sphi %s733, %s790
              $region103: #{batchnorm2d.3} parent=99 // loop_header_branch
                %748 = sbr.rel (%p745) target = $region107
              $region104: #{batchnorm2d.3} parent=99 // loop_body
                %v752 = vld [vmem:[%s750] sm:$0xff]
                %753 = vst [vmem:[%s751] sm:$0xff] %v752
                %v754 = vld [vmem:[%s750 + $0x8] sm:$0xff]
                %755 = vst [vmem:[%s751 + $0x10] sm:$0xff] %v754
                %v756 = vld [vmem:[%s750 + $0x10] sm:$0xff]
                %757 = vst [vmem:[%s751 + $0x20] sm:$0xff] %v756
                %v758 = vld [vmem:[%s750 + $0x18] sm:$0xff]
                %759 = vst [vmem:[%s751 + $0x30] sm:$0xff] %v758
                %v760 = vld [vmem:[%s750 + $0x20] sm:$0xff]
                %761 = vst [vmem:[%s751 + $0x40] sm:$0xff] %v760
                %v762 = vld [vmem:[%s750 + $0x28] sm:$0xff]
                %763 = vst [vmem:[%s751 + $0x50] sm:$0xff] %v762
                %v764 = vld [vmem:[%s750 + $0x30] sm:$0xff]
                %765 = vst [vmem:[%s751 + $0x60] sm:$0xff] %v764
                %v766 = vld [vmem:[%s750 + $0x38] sm:$0xff]
                %767 = vst [vmem:[%s751 + $0x70] sm:$0xff] %v766
                %v768 = vld [vmem:[%s750 + $0x40] sm:$0xff]
                %769 = vst [vmem:[%s751 + $0x80] sm:$0xff] %v768
                %v770 = vld [vmem:[%s750 + $0x48] sm:$0xff]
                %771 = vst [vmem:[%s751 + $0x90] sm:$0xff] %v770
                %v772 = vld [vmem:[%s750 + $0x50] sm:$0xff]
                %773 = vst [vmem:[%s751 + $0xa0] sm:$0xff] %v772
                %v774 = vld [vmem:[%s750 + $0x58] sm:$0xff]
                %775 = vst [vmem:[%s751 + $0xb0] sm:$0xff] %v774
                %v776 = vld [vmem:[%s750 + $0x60] sm:$0xff]
                %777 = vst [vmem:[%s751 + $0xc0] sm:$0xff] %v776
                %v778 = vld [vmem:[%s750 + $0x68] sm:$0xff]
                %779 = vst [vmem:[%s751 + $0xd0] sm:$0xff] %v778
                %v780 = vld [vmem:[%s750 + $0x70] sm:$0xff]
                %781 = vst [vmem:[%s751 + $0xe0] sm:$0xff] %v780
                %v782 = vld [vmem:[%s750 + $0x78] sm:$0xff]
                %783 = vst [vmem:[%s751 + $0xf0] sm:$0xff] %v782
                %s784 = sadd.s32 1, %s749
                %p785 = scmp.ge.s32.totalorder %s784, %s742
                %s786 = scalar_select %p785, 0, %s784
                %s787 = smul.u32 %s786, 128
                %s788 = smul.u32 %s786, 256
                %s789 = scalar_lea.vmem %s718, %s787 [#allocation3]
                %s790 = scalar_lea.vmem %s733, %s788
              $region105: #{batchnorm2d.3} parent=99 // loop_footer
                %s746 = sadd.s32 %s744, 1
              $region106: #{batchnorm2d.3} parent=99 // loop_footer_branch
                %743 = sbr.rel target = $region102
              $region107: #{batchnorm2d.3} parent=99 // loop_exit
                _
              %s791 = sshrl.u32 %s725, 4
              %s792 = sand.u32 %s725, 15
              %s793 = smul.u32 %s791, 16
              %s794 = smul.u32 8, %s793
              %s795 = scalar_lea.vmem %s718, %s794 [#allocation3]
              %s796 = smul.u32 16, %s793
              %s797 = scalar_lea.vmem %s733, %s796
              // While loop
              $region108: #{batchnorm2d.3} parent=99 // loop_pre_header
                _
              $region109: #{batchnorm2d.3} parent=99 // loop_header
                %s799 = sphi 0, %s801
                %p800 = scmp.ge.s32.totalorder %s799, %s792
                %s804 = sphi 0, %s811
                %s805 = sphi %s795, %s814
                %s806 = sphi %s797, %s815
              $region110: #{batchnorm2d.3} parent=99 // loop_header_branch
                %803 = sbr.rel (%p800) target = $region114
              $region111: #{batchnorm2d.3} parent=99 // loop_body
                %v807 = vld [vmem:[%s805] sm:$0xff]
                %808 = vst [vmem:[%s806] sm:$0xff] %v807
                %s809 = sadd.s32 1, %s804
                %p810 = scmp.ge.s32.totalorder %s809, %s792
                %s811 = scalar_select %p810, 0, %s809
                %s812 = smul.u32 %s811, 8
                %s813 = smul.u32 %s811, 16
                %s814 = scalar_lea.vmem %s795, %s812 [#allocation3]
                %s815 = scalar_lea.vmem %s797, %s813
              $region112: #{batchnorm2d.3} parent=99 // loop_footer
                %s801 = sadd.s32 %s799, 1
              $region113: #{batchnorm2d.3} parent=99 // loop_footer_branch
                %798 = sbr.rel target = $region109
              $region114: #{batchnorm2d.3} parent=99 // loop_exit
                _
            $region100: #{batchnorm2d.3} parent=91 // pred_fallthru
              _
          $region92: #{batchnorm2d.3} parent=87 // pred_fallthru
            _
          %894 = vnop
        $region88: #{batchnorm2d.3} parent=79 // pred_fallthru
          _
      $region80: #{batchnorm2d.3} parent=5 // pred_fallthru
        _
      %p895 = scmp.le.s32.totalorder 2, %s9
      // Predicated region
      $region137: #{batchnorm2d.3} parent=5 // pred_check
        %p896 = pneg %p895
      $region138: #{batchnorm2d.3} parent=5 // pred_check_branch
        %898 = sbr.rel (%p896) target = $region140
      $region139: #{batchnorm2d.3} parent=5 // pred_region
        %s899 = ssub.s32 %s9, 2
        // Predicated region
        $region141: #{batchnorm2d.3} parent=139 // pred_check
          %p900 = pneg %p143
        $region142: #{batchnorm2d.3} parent=139 // pred_check_branch
          %902 = sbr.rel (%p900) target = $region144
        $region143: #{batchnorm2d.3} parent=139 // pred_region
          %s903 = sand.u32 %s128, 1
          %s904 = sand.u32 %s128, 1
          %s905 = smul.addr %s904, 128
          %s906 = scalar_lea.vmem [#allocation3], %s905
        $region144: #{batchnorm2d.3} parent=139 // pred_fallthru
          _
      $region140: #{batchnorm2d.3} parent=5 // pred_fallthru
        _
    $region6: #{batchnorm2d.3} parent=1 // loop_footer
      %s13 = sadd.s32 1, %s9
    $region7: #{batchnorm2d.3} parent=1 // loop_footer_branch
      %8 = sbr.rel target = $region3
    $region8: #{batchnorm2d.3} parent=1 // loop_exit
      _

// kernel: batchnorm2d.2
$region0: #{batchnorm2d.2}
  #allocation0 [shape = 'u32[]', space=smem, size = 0x4, offset = 0x4, fixed_abs, tag = 'smem constant byte address 0x4 - core index']
  #allocation1 [shape = 'u32[144,128]{1,0:T(1,128)}', space=vmem, size = 0x12000, scoped, tag = 'internal scratch']
  #allocation2 [shape = 'f32[128,128]{1,0:T(8,128)}', space=vmem, size = 0x10000, scoped, tag = 'scratch operand']
  #allocation3 [shape = 'f32[128,128]{1,0:T(8,128)}', space=vmem, size = 0x10000, scoped, tag = 'scratch operand']
  %s0 = inlined_call_operand.vmem [shape: f32[1,992,196], index: 0, kind: input, shape index: {}]
  %s1 = inlined_call_operand.vmem [shape: f32[992,1], index: 1, kind: input, shape index: {}]
  %s2 = inlined_call_operand.vmem [shape: f32[992,1], index: 2, kind: input, shape index: {}]
  %s3 = inlined_call_operand.vmem [shape: f32[992,1], index: 3, kind: output, shape index: {0}]
  %s4 = inlined_call_operand.vmem [shape: f32[992,1], index: 4, kind: output, shape index: {1}]
  %5 = xla_tuple %s3, %s4
  %s6 = sld [smem:[#allocation0]]
  $region209: #{batchnorm2d.2} parent=0
    _
  %s8 = ssub.s32 1, %s6
  %s9 = scalar_select 0, %s8, %s6
  $region1: #{batchnorm2d.2} parent=0
    #allocation4 [shape = 'u8[131072]{0}', space=vmem, size = 0x20000, scoped, tag = 'input window, operand 0']
    #allocation5 [shape = 'u8[131072]{0}', space=vmem, size = 0x20000, scoped, tag = 'output window, operand 0']
    #allocation6 [shape = 'u8[131072]{0}', space=vmem, size = 0x20000, scoped, tag = 'output window, operand 1']
    loop: start=0, step=1, limit=18
    $region2: #{batchnorm2d.2} parent=1 // loop_pre_header
      _
    $region3: #{batchnorm2d.2} parent=1 // loop_header
      %s11 = sphi 0, %s15
      %p12 = scmp.ge.s32.totalorder %s11, 18
      %s18 = sphi 0, %s37
      %s19 = sphi 0, %s33
      %s20 = sphi 0, %s29
      %s21 = sphi 0, %s18
      %s22 = sphi 0, %s19
      %s23 = sphi 0, %s20
      %s24 = sphi 0, %s21
      %s25 = sphi 0, %s22
      %s26 = sphi 0, %s23
      %s44 = sphi 0, %s46
      %s47 = sphi 0, %s44
      %s48 = sphi 0, %s47
      %s64 = sphi 0, %s48
      %s70 = sphi 0, %s72
      %s73 = sphi 0, %s70
      %s74 = sphi 0, %s73
      %s90 = sphi 0, %s74
      %s96 = sphi 0, %s98
      %s99 = sphi 0, %s96
      %s100 = sphi 0, %s99
      %s116 = sphi 0, %s100
      %s122 = sphi 0, %s124
      %s125 = sphi 0, %s122
      %s126 = sphi 0, %s125
      %s142 = sphi 0, %s126
      %s148 = sphi 0, %s150
      %s151 = sphi 0, %s148
      %s152 = sphi 0, %s151
      %s168 = sphi 0, %s152
    $region4: #{batchnorm2d.2} parent=1 // loop_header_branch
      %14 = sbr.rel (%p12) target = $region8
    $region5: #{batchnorm2d.2} parent=1 // loop_body
      %s16 = ssub.s32 %s11, 1
      %s17 = ssub.s32 %s11, 2
      %s27 = sadd.s32 1, %s20
      %p28 = scmp.ge.s32.totalorder %s27, 2
      %s29 = scalar_select %p28, 0, %s27
      %s30 = sadd.s32 1, %s19
      %s31 = scalar_select %p28, %s30, %s19
      %p32 = scmp.ge.s32.totalorder %s31, 1
      %s33 = scalar_select %p32, 0, %s31
      %s34 = sadd.s32 1, %s18
      %s35 = scalar_select %p32, %s34, %s18
      %p36 = scmp.ge.s32.totalorder %s35, 8
      %s37 = scalar_select %p36, 0, %s35
      %s38 = ssub.s32 %s19, %s33
      %s39 = ssub.s32 %s18, %s37
      %s40 = sor.u32 %s38, %s39
      %s41 = ssub.s32 %s20, %s29
      %s42 = sor.u32 %s40, %s41
      %p43 = scmp.eq.s32.totalorder %s42, 0
      %s45 = sadd.s32 %s44, 1
      %s46 = scalar_select %p43, %s44, %s45
      %p49 = pneg %p43
      %p50 = scmp.eq.s32.totalorder %s11, 15
      %p51 = por %p49, %p50
      %p52 = scmp.ne.s32.totalorder %s44, %s47
      %p53 = scmp.eq.s32.totalorder %s11, 0
      %p54 = por %p52, %p53
      %p55 = scmp.ne.s32.totalorder %s44, %s47
      %p56 = scmp.eq.s32.totalorder %s16, 15
      %p57 = por %p55, %p56
      %p58 = scmp.ne.s32.totalorder %s47, %s48
      %p59 = scmp.eq.s32.totalorder %s16, 0
      %p60 = por %p58, %p59
      %p61 = scmp.ne.s32.totalorder %s47, %s48
      %p62 = scmp.eq.s32.totalorder %s17, 15
      %p63 = por %p61, %p62
      %p65 = scmp.ne.s32.totalorder %s48, %s64
      %p66 = scmp.eq.s32.totalorder %s17, 0
      %p67 = por %p65, %p66
      %s68 = ssub.s32 %s18, %s37
      %p69 = scmp.eq.s32.totalorder %s68, 0
      %s71 = sadd.s32 %s70, 1
      %s72 = scalar_select %p69, %s70, %s71
      %p75 = pneg %p69
      %p76 = scmp.eq.s32.totalorder %s11, 15
      %p77 = por %p75, %p76
      %p78 = scmp.ne.s32.totalorder %s70, %s73
      %p79 = scmp.eq.s32.totalorder %s11, 0
      %p80 = por %p78, %p79
      %p81 = scmp.ne.s32.totalorder %s70, %s73
      %p82 = scmp.eq.s32.totalorder %s16, 15
      %p83 = por %p81, %p82
      %p84 = scmp.ne.s32.totalorder %s73, %s74
      %p85 = scmp.eq.s32.totalorder %s16, 0
      %p86 = por %p84, %p85
      %p87 = scmp.ne.s32.totalorder %s73, %s74
      %p88 = scmp.eq.s32.totalorder %s17, 15
      %p89 = por %p87, %p88
      %p91 = scmp.ne.s32.totalorder %s74, %s90
      %p92 = scmp.eq.s32.totalorder %s17, 0
      %p93 = por %p91, %p92
      %s94 = ssub.s32 %s18, %s37
      %p95 = scmp.eq.s32.totalorder %s94, 0
      %s97 = sadd.s32 %s96, 1
      %s98 = scalar_select %p95, %s96, %s97
      %p101 = pneg %p95
      %p102 = scmp.eq.s32.totalorder %s11, 15
      %p103 = por %p101, %p102
      %p104 = scmp.ne.s32.totalorder %s96, %s99
      %p105 = scmp.eq.s32.totalorder %s11, 0
      %p106 = por %p104, %p105
      %p107 = scmp.ne.s32.totalorder %s96, %s99
      %p108 = scmp.eq.s32.totalorder %s16, 15
      %p109 = por %p107, %p108
      %p110 = scmp.ne.s32.totalorder %s99, %s100
      %p111 = scmp.eq.s32.totalorder %s16, 0
      %p112 = por %p110, %p111
      %p113 = scmp.ne.s32.totalorder %s99, %s100
      %p114 = scmp.eq.s32.totalorder %s17, 15
      %p115 = por %p113, %p114
      %p117 = scmp.ne.s32.totalorder %s100, %s116
      %p118 = scmp.eq.s32.totalorder %s17, 0
      %p119 = por %p117, %p118
      %s120 = ssub.s32 %s18, %s37
      %p121 = scmp.eq.s32.totalorder %s120, 0
      %s123 = sadd.s32 %s122, 1
      %s124 = scalar_select %p121, %s122, %s123
      %p127 = pneg %p121
      %p128 = scmp.eq.s32.totalorder %s11, 15
      %p129 = por %p127, %p128
      %p130 = scmp.ne.s32.totalorder %s122, %s125
      %p131 = scmp.eq.s32.totalorder %s11, 0
      %p132 = por %p130, %p131
      %p133 = scmp.ne.s32.totalorder %s122, %s125
      %p134 = scmp.eq.s32.totalorder %s16, 15
      %p135 = por %p133, %p134
      %p136 = scmp.ne.s32.totalorder %s125, %s126
      %p137 = scmp.eq.s32.totalorder %s16, 0
      %p138 = por %p136, %p137
      %p139 = scmp.ne.s32.totalorder %s125, %s126
      %p140 = scmp.eq.s32.totalorder %s17, 15
      %p141 = por %p139, %p140
      %p143 = scmp.ne.s32.totalorder %s126, %s142
      %p144 = scmp.eq.s32.totalorder %s17, 0
      %p145 = por %p143, %p144
      %s146 = ssub.s32 %s18, %s37
      %p147 = scmp.eq.s32.totalorder %s146, 0
      %s149 = sadd.s32 %s148, 1
      %s150 = scalar_select %p147, %s148, %s149
      %p153 = pneg %p147
      %p154 = scmp.eq.s32.totalorder %s11, 15
      %p155 = por %p153, %p154
      %p156 = scmp.ne.s32.totalorder %s148, %s151
      %p157 = scmp.eq.s32.totalorder %s11, 0
      %p158 = por %p156, %p157
      %p159 = scmp.ne.s32.totalorder %s148, %s151
      %p160 = scmp.eq.s32.totalorder %s16, 15
      %p161 = por %p159, %p160
      %p162 = scmp.ne.s32.totalorder %s151, %s152
      %p163 = scmp.eq.s32.totalorder %s16, 0
      %p164 = por %p162, %p163
      %p165 = scmp.ne.s32.totalorder %s151, %s152
      %p166 = scmp.eq.s32.totalorder %s17, 15
      %p167 = por %p165, %p166
      %p169 = scmp.ne.s32.totalorder %s152, %s168
      %p170 = scmp.eq.s32.totalorder %s17, 0
      %p171 = por %p169, %p170
      %p172 = scmp.le.s32.totalorder 1, %s11
      %p173 = scmp.lt.s32.totalorder %s11, 17
      %p174 = pnand %p172, %p173
      %p175 = pneg %p174
      // Predicated region
      $region9: #{batchnorm2d.2} parent=5 // pred_check
        _
      $region10: #{batchnorm2d.2} parent=5 // pred_check_branch
        %177 = sbr.rel (%p174) target = $region12
      $region11: #{batchnorm2d.2} parent=5 // pred_region
        %s178 = ssub.s32 %s11, 1
      $region12: #{batchnorm2d.2} parent=5 // pred_fallthru
        _
      %p179 = scmp.lt.s32.totalorder %s11, 16
      // Predicated region
      $region13: #{batchnorm2d.2} parent=5 // pred_check
        %p180 = pneg %p179
      $region14: #{batchnorm2d.2} parent=5 // pred_check_branch
        %182 = sbr.rel (%p180) target = $region16
      $region15: #{batchnorm2d.2} parent=5 // pred_region
        // Predicated region
        $region17: #{batchnorm2d.2} parent=15 // pred_check
          %p183 = pneg %p54
        $region18: #{batchnorm2d.2} parent=15 // pred_check_branch
          %185 = sbr.rel (%p183) target = $region20
        $region19: #{batchnorm2d.2} parent=15 // pred_region
          %s186 = sand.u32 %s44, 1
          %s187 = sand.u32 %s44, 1
          %s188 = smul.addr %s187, 128
          %s189 = scalar_lea.vmem [#allocation4], %s188
          %s190 = smul.u32 16, %s18
          %s191 = ssub.s32 124, %s190
          %p192 = scmp.lt.s32.totalorder %s191, 16
          %s193 = scalar_select %p192, %s191, 16
          %s194 = smul.u32 128, %s193
          %p195 = scmp.ne.s32.totalorder 0, %s194
          %s196 = smul.addr %s190, 2
          %s197 = sadd.s32 %s20, %s196
          %s198 = smul.addr %s19, 248
          %s199 = sadd.s32 %s197, %s198
          %s200 = smul.addr %s199, 8
          %s201 = scalar_lea.vmem %s0, %s200
          // Predicated region
          $region21: #{batchnorm2d.2} parent=19 // pred_check
            %p202 = pneg %p195
          $region22: #{batchnorm2d.2} parent=19 // pred_check_branch
            %204 = sbr.rel (%p202) target = $region24
          $region23: #{batchnorm2d.2} parent=19 // pred_region
            // Predicated region
            $region25: #{batchnorm2d.2} parent=23 // pred_check
              _
            $region26: #{batchnorm2d.2} parent=23 // pred_check_branch
              %206 = sbr.rel (0) target = $region28
            $region27: #{batchnorm2d.2} parent=23 // pred_region
              // Predicated region
              $region47: #{batchnorm2d.2} parent=27 // pred_check
                _
              $region48: #{batchnorm2d.2} parent=27 // pred_check_branch
                %285 = sbr.rel (0) target = $region50
              $region49: #{batchnorm2d.2} parent=27 // pred_region
                %s286 = sshrl.u32 %s193, 4
                // While loop
                $region51: #{batchnorm2d.2} parent=49 // loop_pre_header
                  _
                $region52: #{batchnorm2d.2} parent=49 // loop_header
                  %s288 = sphi 0, %s290
                  %p289 = scmp.ge.s32.totalorder %s288, %s286
                  %s293 = sphi 0, %s330
                  %s294 = sphi %s201, %s333
                  %s295 = sphi %s189, %s334
                $region53: #{batchnorm2d.2} parent=49 // loop_header_branch
                  %292 = sbr.rel (%p289) target = $region57
                $region54: #{batchnorm2d.2} parent=49 // loop_body
                  %v296 = vld [vmem:[%s294] sm:$0xff]
                  %297 = vst [vmem:[%s295] sm:$0xff] %v296
                  %v298 = vld [vmem:[%s294 + $0x10] sm:$0xff]
                  %299 = vst [vmem:[%s295 + $0x8] sm:$0xff] %v298
                  %v300 = vld [vmem:[%s294 + $0x20] sm:$0xff]
                  %301 = vst [vmem:[%s295 + $0x10] sm:$0xff] %v300
                  %v302 = vld [vmem:[%s294 + $0x30] sm:$0xff]
                  %303 = vst [vmem:[%s295 + $0x18] sm:$0xff] %v302
                  %v304 = vld [vmem:[%s294 + $0x40] sm:$0xff]
                  %305 = vst [vmem:[%s295 + $0x20] sm:$0xff] %v304
                  %v306 = vld [vmem:[%s294 + $0x50] sm:$0xff]
                  %307 = vst [vmem:[%s295 + $0x28] sm:$0xff] %v306
                  %v308 = vld [vmem:[%s294 + $0x60] sm:$0xff]
                  %309 = vst [vmem:[%s295 + $0x30] sm:$0xff] %v308
                  %v310 = vld [vmem:[%s294 + $0x70] sm:$0xff]
                  %311 = vst [vmem:[%s295 + $0x38] sm:$0xff] %v310
                  %v312 = vld [vmem:[%s294 + $0x80] sm:$0xff]
                  %313 = vst [vmem:[%s295 + $0x40] sm:$0xff] %v312
                  %v314 = vld [vmem:[%s294 + $0x90] sm:$0xff]
                  %315 = vst [vmem:[%s295 + $0x48] sm:$0xff] %v314
                  %v316 = vld [vmem:[%s294 + $0xa0] sm:$0xff]
                  %317 = vst [vmem:[%s295 + $0x50] sm:$0xff] %v316
                  %v318 = vld [vmem:[%s294 + $0xb0] sm:$0xff]
                  %319 = vst [vmem:[%s295 + $0x58] sm:$0xff] %v318
                  %v320 = vld [vmem:[%s294 + $0xc0] sm:$0xff]
                  %321 = vst [vmem:[%s295 + $0x60] sm:$0xff] %v320
                  %v322 = vld [vmem:[%s294 + $0xd0] sm:$0xff]
                  %323 = vst [vmem:[%s295 + $0x68] sm:$0xff] %v322
                  %v324 = vld [vmem:[%s294 + $0xe0] sm:$0xff]
                  %325 = vst [vmem:[%s295 + $0x70] sm:$0xff] %v324
                  %v326 = vld [vmem:[%s294 + $0xf0] sm:$0xff]
                  %327 = vst [vmem:[%s295 + $0x78] sm:$0xff] %v326
                  %s328 = sadd.s32 1, %s293
                  %p329 = scmp.ge.s32.totalorder %s328, %s286
                  %s330 = scalar_select %p329, 0, %s328
                  %s331 = smul.u32 %s330, 256
                  %s332 = smul.u32 %s330, 128
                  %s333 = scalar_lea.vmem %s201, %s331
                  %s334 = scalar_lea.vmem %s189, %s332 [#allocation4]
                $region55: #{batchnorm2d.2} parent=49 // loop_footer
                  %s290 = sadd.s32 %s288, 1
                $region56: #{batchnorm2d.2} parent=49 // loop_footer_branch
                  %287 = sbr.rel target = $region52
                $region57: #{batchnorm2d.2} parent=49 // loop_exit
                  _
                %s335 = sshrl.u32 %s193, 4
                %s336 = sand.u32 %s193, 15
                %s337 = smul.u32 %s335, 16
                %s338 = smul.u32 16, %s337
                %s339 = scalar_lea.vmem %s201, %s338
                %s340 = smul.u32 8, %s337
                %s341 = scalar_lea.vmem %s189, %s340 [#allocation4]
                // While loop
                $region58: #{batchnorm2d.2} parent=49 // loop_pre_header
                  _
                $region59: #{batchnorm2d.2} parent=49 // loop_header
                  %s343 = sphi 0, %s345
                  %p344 = scmp.ge.s32.totalorder %s343, %s336
                  %s348 = sphi 0, %s355
                  %s349 = sphi %s339, %s358
                  %s350 = sphi %s341, %s359
                $region60: #{batchnorm2d.2} parent=49 // loop_header_branch
                  %347 = sbr.rel (%p344) target = $region64
                $region61: #{batchnorm2d.2} parent=49 // loop_body
                  %v351 = vld [vmem:[%s349] sm:$0xff]
                  %352 = vst [vmem:[%s350] sm:$0xff] %v351
                  %s353 = sadd.s32 1, %s348
                  %p354 = scmp.ge.s32.totalorder %s353, %s336
                  %s355 = scalar_select %p354, 0, %s353
                  %s356 = smul.u32 %s355, 16
                  %s357 = smul.u32 %s355, 8
                  %s358 = scalar_lea.vmem %s339, %s356
                  %s359 = scalar_lea.vmem %s341, %s357 [#allocation4]
                $region62: #{batchnorm2d.2} parent=49 // loop_footer
                  %s345 = sadd.s32 %s343, 1
                $region63: #{batchnorm2d.2} parent=49 // loop_footer_branch
                  %342 = sbr.rel target = $region59
                $region64: #{batchnorm2d.2} parent=49 // loop_exit
                  _
              $region50: #{batchnorm2d.2} parent=27 // pred_fallthru
                _
              // Predicated region
              $region65: #{batchnorm2d.2} parent=27 // pred_check
                _
              $region66: #{batchnorm2d.2} parent=27 // pred_check_branch
                %361 = sbr.rel target = $region68
              $region67: #{batchnorm2d.2} parent=27 // pred_region
                _
              $region68: #{batchnorm2d.2} parent=27 // pred_fallthru
                _
            $region28: #{batchnorm2d.2} parent=23 // pred_fallthru
              _
            // Predicated region
            $region29: #{batchnorm2d.2} parent=23 // pred_check
              _
            $region30: #{batchnorm2d.2} parent=23 // pred_check_branch
              %208 = sbr.rel target = $region32
            $region31: #{batchnorm2d.2} parent=23 // pred_region
              %s210 = sshrl.u32 %s193, 4
              // While loop
              $region33: #{batchnorm2d.2} parent=31 // loop_pre_header
                _
              $region34: #{batchnorm2d.2} parent=31 // loop_header
                %s212 = sphi 0, %s214
                %p213 = scmp.ge.s32.totalorder %s212, %s210
                %s217 = sphi 0, %s254
                %s218 = sphi %s201, %s257
                %s219 = sphi %s189, %s258
              $region35: #{batchnorm2d.2} parent=31 // loop_header_branch
                %216 = sbr.rel (%p213) target = $region39
              $region36: #{batchnorm2d.2} parent=31 // loop_body
                %v220 = vld [vmem:[%s218] sm:$0xff]
                %221 = vst [vmem:[%s219] sm:$0xff] %v220
                %v222 = vld [vmem:[%s218 + $0x10] sm:$0xff]
                %223 = vst [vmem:[%s219 + $0x8] sm:$0xff] %v222
                %v224 = vld [vmem:[%s218 + $0x20] sm:$0xff]
                %225 = vst [vmem:[%s219 + $0x10] sm:$0xff] %v224
                %v226 = vld [vmem:[%s218 + $0x30] sm:$0xff]
                %227 = vst [vmem:[%s219 + $0x18] sm:$0xff] %v226
                %v228 = vld [vmem:[%s218 + $0x40] sm:$0xff]
                %229 = vst [vmem:[%s219 + $0x20] sm:$0xff] %v228
                %v230 = vld [vmem:[%s218 + $0x50] sm:$0xff]
                %231 = vst [vmem:[%s219 + $0x28] sm:$0xff] %v230
                %v232 = vld [vmem:[%s218 + $0x60] sm:$0xff]
                %233 = vst [vmem:[%s219 + $0x30] sm:$0xff] %v232
                %v234 = vld [vmem:[%s218 + $0x70] sm:$0xff]
                %235 = vst [vmem:[%s219 + $0x38] sm:$0xff] %v234
                %v236 = vld [vmem:[%s218 + $0x80] sm:$0xff]
                %237 = vst [vmem:[%s219 + $0x40] sm:$0xff] %v236
                %v238 = vld [vmem:[%s218 + $0x90] sm:$0xff]
                %239 = vst [vmem:[%s219 + $0x48] sm:$0xff] %v238
                %v240 = vld [vmem:[%s218 + $0xa0] sm:$0xff]
                %241 = vst [vmem:[%s219 + $0x50] sm:$0xff] %v240
                %v242 = vld [vmem:[%s218 + $0xb0] sm:$0xff]
                %243 = vst [vmem:[%s219 + $0x58] sm:$0xff] %v242
                %v244 = vld [vmem:[%s218 + $0xc0] sm:$0xff]
                %245 = vst [vmem:[%s219 + $0x60] sm:$0xff] %v244
                %v246 = vld [vmem:[%s218 + $0xd0] sm:$0xff]
                %247 = vst [vmem:[%s219 + $0x68] sm:$0xff] %v246
                %v248 = vld [vmem:[%s218 + $0xe0] sm:$0xff]
                %249 = vst [vmem:[%s219 + $0x70] sm:$0xff] %v248
                %v250 = vld [vmem:[%s218 + $0xf0] sm:$0xff]
                %251 = vst [vmem:[%s219 + $0x78] sm:$0xff] %v250
                %s252 = sadd.s32 1, %s217
                %p253 = scmp.ge.s32.totalorder %s252, %s210
                %s254 = scalar_select %p253, 0, %s252
                %s255 = smul.u32 %s254, 256
                %s256 = smul.u32 %s254, 128
                %s257 = scalar_lea.vmem %s201, %s255
                %s258 = scalar_lea.vmem %s189, %s256 [#allocation4]
              $region37: #{batchnorm2d.2} parent=31 // loop_footer
                %s214 = sadd.s32 %s212, 1
              $region38: #{batchnorm2d.2} parent=31 // loop_footer_branch
                %211 = sbr.rel target = $region34
              $region39: #{batchnorm2d.2} parent=31 // loop_exit
                _
              %s259 = sshrl.u32 %s193, 4
              %s260 = sand.u32 %s193, 15
              %s261 = smul.u32 %s259, 16
              %s262 = smul.u32 16, %s261
              %s263 = scalar_lea.vmem %s201, %s262
              %s264 = smul.u32 8, %s261
              %s265 = scalar_lea.vmem %s189, %s264 [#allocation4]
              // While loop
              $region40: #{batchnorm2d.2} parent=31 // loop_pre_header
                _
              $region41: #{batchnorm2d.2} parent=31 // loop_header
                %s267 = sphi 0, %s269
                %p268 = scmp.ge.s32.totalorder %s267, %s260
                %s272 = sphi 0, %s279
                %s273 = sphi %s263, %s282
                %s274 = sphi %s265, %s283
              $region42: #{batchnorm2d.2} parent=31 // loop_header_branch
                %271 = sbr.rel (%p268) target = $region46
              $region43: #{batchnorm2d.2} parent=31 // loop_body
                %v275 = vld [vmem:[%s273] sm:$0xff]
                %276 = vst [vmem:[%s274] sm:$0xff] %v275
                %s277 = sadd.s32 1, %s272
                %p278 = scmp.ge.s32.totalorder %s277, %s260
                %s279 = scalar_select %p278, 0, %s277
                %s280 = smul.u32 %s279, 16
                %s281 = smul.u32 %s279, 8
                %s282 = scalar_lea.vmem %s263, %s280
                %s283 = scalar_lea.vmem %s265, %s281 [#allocation4]
              $region44: #{batchnorm2d.2} parent=31 // loop_footer
                %s269 = sadd.s32 %s267, 1
              $region45: #{batchnorm2d.2} parent=31 // loop_footer_branch
                %266 = sbr.rel target = $region41
              $region46: #{batchnorm2d.2} parent=31 // loop_exit
                _
            $region32: #{batchnorm2d.2} parent=23 // pred_fallthru
              _
          $region24: #{batchnorm2d.2} parent=19 // pred_fallthru
            _
          %362 = vnop
        $region20: #{batchnorm2d.2} parent=15 // pred_fallthru
          _
        // Predicated region
        $region69: #{batchnorm2d.2} parent=15 // pred_check
          %p363 = pneg %p80
        $region70: #{batchnorm2d.2} parent=15 // pred_check_branch
          %365 = sbr.rel (%p363) target = $region72
        $region71: #{batchnorm2d.2} parent=15 // pred_region
          %s366 = smul.u32 16, %s18
          %s367 = ssub.s32 124, %s366
          %p368 = scmp.lt.s32.totalorder %s367, 16
          %s369 = scalar_select %p368, %s367, 16
          %s370 = smul.u32 128, %s369
          %p371 = scmp.lt.s32.totalorder %s366, 123
          %s372 = scalar_select %p371, %s366, 123
          %s373 = smul.addr %s372, 8
          %s374 = scalar_lea.vmem %s1, %s373
          %s375 = smul.u32 16, %s18
          %s376 = ssub.s32 124, %s375
          %p377 = scmp.lt.s32.totalorder %s376, 16
          %s378 = scalar_select %p377, %s376, 16
          %s379 = smul.u32 128, %s378
        $region72: #{batchnorm2d.2} parent=15 // pred_fallthru
          _
        // Predicated region
        $region73: #{batchnorm2d.2} parent=15 // pred_check
          %p380 = pneg %p106
        $region74: #{batchnorm2d.2} parent=15 // pred_check_branch
          %382 = sbr.rel (%p380) target = $region76
        $region75: #{batchnorm2d.2} parent=15 // pred_region
          %s383 = smul.u32 16, %s18
          %s384 = ssub.s32 124, %s383
          %p385 = scmp.lt.s32.totalorder %s384, 16
          %s386 = scalar_select %p385, %s384, 16
          %s387 = smul.u32 128, %s386
          %p388 = scmp.lt.s32.totalorder %s383, 123
          %s389 = scalar_select %p388, %s383, 123
          %s390 = smul.addr %s389, 8
          %s391 = scalar_lea.vmem %s2, %s390
          %s392 = smul.u32 16, %s18
          %s393 = ssub.s32 124, %s392
          %p394 = scmp.lt.s32.totalorder %s393, 16
          %s395 = scalar_select %p394, %s393, 16
          %s396 = smul.u32 128, %s395
        $region76: #{batchnorm2d.2} parent=15 // pred_fallthru
          _
      $region16: #{batchnorm2d.2} parent=5 // pred_fallthru
        _
      %p397 = scmp.le.s32.totalorder 1, %s11
      %p398 = scmp.lt.s32.totalorder %s11, 17
      %p399 = pnand %p397, %p398
      %p400 = pneg %p399
      // Predicated region
      $region77: #{batchnorm2d.2} parent=5 // pred_check
        _
      $region78: #{batchnorm2d.2} parent=5 // pred_check_branch
        %402 = sbr.rel (%p399) target = $region80
      $region79: #{batchnorm2d.2} parent=5 // pred_region
        %s403 = ssub.s32 %s11, 1
        %s404 = sand.u32 %s47, 1
        %s405 = sand.u32 %s47, 1
        %s406 = smul.addr %s405, 128
        %s407 = scalar_lea.vmem [#allocation4], %s406
        // Predicated region
        $region81: #{batchnorm2d.2} parent=79 // pred_check
          %p408 = pneg %p60
        $region82: #{batchnorm2d.2} parent=79 // pred_check_branch
          %410 = sbr.rel (%p408) target = $region84
        $region83: #{batchnorm2d.2} parent=79 // pred_region
          _
        $region84: #{batchnorm2d.2} parent=79 // pred_fallthru
          _
        %s411 = sand.u32 %s47, 1
        %s412 = sand.u32 %s47, 1
        %s413 = smul.addr %s412, 128
        %s414 = scalar_lea.vmem [#allocation4], %s413
        %p415 = pneg %p60
        %p416 = pneg %p57
        %s417 = smul.u32 16, %s21
        %s418 = ssub.s32 124, %s417
        %p419 = scmp.lt.s32.totalorder %s418, 16
        %s420 = scalar_select %p419, %s418, 16
        %s421 = smul.u32 128, %s420
        %p422 = scmp.lt.s32.totalorder %s417, 123
        %s423 = scalar_select %p422, %s417, 123
        %s424 = smul.addr %s423, 8
        %s425 = scalar_lea.vmem %s1, %s424
        %p426 = pneg %p86
        %p427 = pneg %p83
        %s428 = smul.u32 16, %s21
        %s429 = ssub.s32 124, %s428
        %p430 = scmp.lt.s32.totalorder %s429, 16
        %s431 = scalar_select %p430, %s429, 16
        %s432 = smul.u32 128, %s431
        %p433 = scmp.lt.s32.totalorder %s428, 123
        %s434 = scalar_select %p433, %s428, 123
        %s435 = smul.addr %s434, 8
        %s436 = scalar_lea.vmem %s2, %s435
        %p437 = pneg %p112
        %p438 = pneg %p109
        %p439 = pneg %p138
        %p440 = pneg %p135
        %s441 = sand.u32 %s125, 1
        %s442 = sand.u32 %s125, 1
        %s443 = smul.addr %s442, 128
        %s444 = scalar_lea.vmem [#allocation5], %s443
        %p445 = pneg %p164
        %p446 = pneg %p161
        %s447 = sand.u32 %s151, 1
        %s448 = sand.u32 %s151, 1
        %s449 = smul.addr %s448, 128
        %s450 = scalar_lea.vmem [#allocation6], %s449
        %s451 = smul.u32 16, %s21
        %s452 = ssub.s32 124, %s451
        %p453 = scmp.lt.s32.totalorder %s452, 16
        %s454 = scalar_select %p453, %s452, 16
        %s455 = smul.u32 128, %s454
        %s456 = smul.u32 16, %s21
        %s457 = ssub.s32 124, %s456
        %p458 = scmp.lt.s32.totalorder %s457, 16
        %s459 = scalar_select %p458, %s457, 16
        %s460 = smul.u32 128, %s459
        %p461 = scmp.lt.s32.totalorder %s456, 123
        %s462 = scalar_select %p461, %s456, 123
        %s463 = smul.addr %s462, 8
        %s464 = scalar_lea.vmem %s1, %s463
        %s465 = smul.u32 16, %s21
        %s466 = ssub.s32 124, %s465
        %p467 = scmp.lt.s32.totalorder %s466, 16
        %s468 = scalar_select %p467, %s466, 16
        %s469 = smul.u32 128, %s468
        %s470 = smul.u32 16, %s21
        %s471 = ssub.s32 124, %s470
        %p472 = scmp.lt.s32.totalorder %s471, 16
        %s473 = scalar_select %p472, %s471, 16
        %s474 = smul.u32 128, %s473
        %p475 = scmp.lt.s32.totalorder %s470, 123
        %s476 = scalar_select %p475, %s470, 123
        %s477 = smul.addr %s476, 8
        %s478 = scalar_lea.vmem %s2, %s477
        %s479 = smul.u32 16, %s21
        %s480 = ssub.s32 124, %s479
        %p481 = scmp.lt.s32.totalorder %s480, 16
        %s482 = scalar_select %p481, %s480, 16
        %s483 = smul.u32 128, %s482
        %s484 = smul.u32 16, %s21
        %s485 = ssub.s32 124, %s484
        %p486 = scmp.lt.s32.totalorder %s485, 16
        %s487 = scalar_select %p486, %s485, 16
        %s488 = smul.u32 128, %s487
        %s489 = smul.u32 16, %s21
        %s490 = ssub.s32 124, %s489
        %p491 = scmp.lt.s32.totalorder %s490, 16
        %s492 = scalar_select %p491, %s490, 16
        %s493 = smul.u32 128, %s492
        %p494 = scmp.eq.s32.totalorder %s22, 0
        %p495 = scmp.eq.s32.totalorder %s23, 0
        %p496 = pnand %p494, %p495
        %p497 = pneg %p496
        // Predicated region
        $region85: #{batchnorm2d.2} parent=79 // pred_check
          _
        $region86: #{batchnorm2d.2} parent=79 // pred_check_branch
          %499 = sbr.rel (%p496) target = $region88
        $region87: #{batchnorm2d.2} parent=79 // pred_region
          %500 = vst [vmem:[#allocation2] sm:$0xff] 0.0
          %501 = vst [vmem:[#allocation2 + $0x8] sm:$0xff] 0.0
          %502 = vst [vmem:[#allocation2 + $0x10] sm:$0xff] 0.0
          %503 = vst [vmem:[#allocation2 + $0x18] sm:$0xff] 0.0
          %504 = vst [vmem:[#allocation2 + $0x20] sm:$0xff] 0.0
          %505 = vst [vmem:[#allocation2 + $0x28] sm:$0xff] 0.0
          %506 = vst [vmem:[#allocation2 + $0x30] sm:$0xff] 0.0
          %507 = vst [vmem:[#allocation2 + $0x38] sm:$0xff] 0.0
          %508 = vst [vmem:[#allocation2 + $0x40] sm:$0xff] 0.0
          %509 = vst [vmem:[#allocation2 + $0x48] sm:$0xff] 0.0
          %510 = vst [vmem:[#allocation2 + $0x50] sm:$0xff] 0.0
          %511 = vst [vmem:[#allocation2 + $0x58] sm:$0xff] 0.0
          %512 = vst [vmem:[#allocation2 + $0x60] sm:$0xff] 0.0
          %513 = vst [vmem:[#allocation2 + $0x68] sm:$0xff] 0.0
          %514 = vst [vmem:[#allocation2 + $0x70] sm:$0xff] 0.0
          %515 = vst [vmem:[#allocation2 + $0x78] sm:$0xff] 0.0
          %516 = vst [vmem:[#allocation3] sm:$0xff] 0.0
          %517 = vst [vmem:[#allocation3 + $0x8] sm:$0xff] 0.0
          %518 = vst [vmem:[#allocation3 + $0x10] sm:$0xff] 0.0
          %519 = vst [vmem:[#allocation3 + $0x18] sm:$0xff] 0.0
          %520 = vst [vmem:[#allocation3 + $0x20] sm:$0xff] 0.0
          %521 = vst [vmem:[#allocation3 + $0x28] sm:$0xff] 0.0
          %522 = vst [vmem:[#allocation3 + $0x30] sm:$0xff] 0.0
          %523 = vst [vmem:[#allocation3 + $0x38] sm:$0xff] 0.0
          %524 = vst [vmem:[#allocation3 + $0x40] sm:$0xff] 0.0
          %525 = vst [vmem:[#allocation3 + $0x48] sm:$0xff] 0.0
          %526 = vst [vmem:[#allocation3 + $0x50] sm:$0xff] 0.0
          %527 = vst [vmem:[#allocation3 + $0x58] sm:$0xff] 0.0
          %528 = vst [vmem:[#allocation3 + $0x60] sm:$0xff] 0.0
          %529 = vst [vmem:[#allocation3 + $0x68] sm:$0xff] 0.0
          %530 = vst [vmem:[#allocation3 + $0x70] sm:$0xff] 0.0
          %531 = vst [vmem:[#allocation3 + $0x78] sm:$0xff] 0.0
        $region88: #{batchnorm2d.2} parent=79 // pred_fallthru
          _
        %v532 = vld [vmem:[%s407] sm:$0xff]
        %v533 = vld [vmem:[%s407 + $0x8] sm:$0xff]
        %v534 = vld [vmem:[%s407 + $0x10] sm:$0xff]
        %v535 = vld [vmem:[%s407 + $0x18] sm:$0xff]
        %v536 = vld [vmem:[%s407 + $0x20] sm:$0xff]
        %v537 = vld [vmem:[%s407 + $0x28] sm:$0xff]
        %v538 = vld [vmem:[%s407 + $0x30] sm:$0xff]
        %v539 = vld [vmem:[%s407 + $0x38] sm:$0xff]
        %v540 = vld [vmem:[%s407 + $0x40] sm:$0xff]
        %v541 = vld [vmem:[%s407 + $0x48] sm:$0xff]
        %v542 = vld [vmem:[%s407 + $0x50] sm:$0xff]
        %v543 = vld [vmem:[%s407 + $0x58] sm:$0xff]
        %v544 = vld [vmem:[%s407 + $0x60] sm:$0xff]
        %v545 = vld [vmem:[%s407 + $0x68] sm:$0xff]
        %v546 = vld [vmem:[%s407 + $0x70] sm:$0xff]
        %v547 = vld [vmem:[%s407 + $0x78] sm:$0xff]
        %v548 = vlaneseq
        %v549 = vand.u32 %v548, 127
        %s550 = smul.u32 %s23, 128
        %v551 = vstv %s550
        %v552 = vadd.s32 %v551, %v549
        %vm553 = vcmp.lt.s32.totalorder %v552, 196
        %v554 = vsel %vm553, %v532, 0.0
        %v555 = vsel %vm553, %v533, 0.0
        %v556 = vsel %vm553, %v534, 0.0
        %v557 = vsel %vm553, %v535, 0.0
        %v558 = vsel %vm553, %v536, 0.0
        %v559 = vsel %vm553, %v537, 0.0
        %v560 = vsel %vm553, %v538, 0.0
        %v561 = vsel %vm553, %v539, 0.0
        %v562 = vsel %vm553, %v540, 0.0
        %v563 = vsel %vm553, %v541, 0.0
        %v564 = vsel %vm553, %v542, 0.0
        %v565 = vsel %vm553, %v543, 0.0
        %v566 = vsel %vm553, %v544, 0.0
        %v567 = vsel %vm553, %v545, 0.0
        %v568 = vsel %vm553, %v546, 0.0
        %v569 = vsel %vm553, %v547, 0.0
        %v570 = vld [vmem:[#allocation2] sm:$0xff]
        %v571 = vld [vmem:[#allocation2 + $0x8] sm:$0xff]
        %v572 = vld [vmem:[#allocation2 + $0x10] sm:$0xff]
        %v573 = vld [vmem:[#allocation2 + $0x18] sm:$0xff]
        %v574 = vld [vmem:[#allocation2 + $0x20] sm:$0xff]
        %v575 = vld [vmem:[#allocation2 + $0x28] sm:$0xff]
        %v576 = vld [vmem:[#allocation2 + $0x30] sm:$0xff]
        %v577 = vld [vmem:[#allocation2 + $0x38] sm:$0xff]
        %v578 = vld [vmem:[#allocation2 + $0x40] sm:$0xff]
        %v579 = vld [vmem:[#allocation2 + $0x48] sm:$0xff]
        %v580 = vld [vmem:[#allocation2 + $0x50] sm:$0xff]
        %v581 = vld [vmem:[#allocation2 + $0x58] sm:$0xff]
        %v582 = vld [vmem:[#allocation2 + $0x60] sm:$0xff]
        %v583 = vld [vmem:[#allocation2 + $0x68] sm:$0xff]
        %v584 = vld [vmem:[#allocation2 + $0x70] sm:$0xff]
        %v585 = vld [vmem:[#allocation2 + $0x78] sm:$0xff]
        %v586 = vadd.f32 %v570, %v554
        %v587 = vadd.f32 %v571, %v555
        %v588 = vadd.f32 %v572, %v556
        %v589 = vadd.f32 %v573, %v557
        %v590 = vadd.f32 %v574, %v558
        %v591 = vadd.f32 %v575, %v559
        %v592 = vadd.f32 %v576, %v560
        %v593 = vadd.f32 %v577, %v561
        %v594 = vadd.f32 %v578, %v562
        %v595 = vadd.f32 %v579, %v563
        %v596 = vadd.f32 %v580, %v564
        %v597 = vadd.f32 %v581, %v565
        %v598 = vadd.f32 %v582, %v566
        %v599 = vadd.f32 %v583, %v567
        %v600 = vadd.f32 %v584, %v568
        %v601 = vadd.f32 %v585, %v569
        %602 = vst [vmem:[#allocation2] sm:$0xff] %v586
        %603 = vst [vmem:[#allocation2 + $0x8] sm:$0xff] %v587
        %604 = vst [vmem:[#allocation2 + $0x10] sm:$0xff] %v588
        %605 = vst [vmem:[#allocation2 + $0x18] sm:$0xff] %v589
        %606 = vst [vmem:[#allocation2 + $0x20] sm:$0xff] %v590
        %607 = vst [vmem:[#allocation2 + $0x28] sm:$0xff] %v591
        %608 = vst [vmem:[#allocation2 + $0x30] sm:$0xff] %v592
        %609 = vst [vmem:[#allocation2 + $0x38] sm:$0xff] %v593
        %610 = vst [vmem:[#allocation2 + $0x40] sm:$0xff] %v594
        %611 = vst [vmem:[#allocation2 + $0x48] sm:$0xff] %v595
        %612 = vst [vmem:[#allocation2 + $0x50] sm:$0xff] %v596
        %613 = vst [vmem:[#allocation2 + $0x58] sm:$0xff] %v597
        %614 = vst [vmem:[#allocation2 + $0x60] sm:$0xff] %v598
        %615 = vst [vmem:[#allocation2 + $0x68] sm:$0xff] %v599
        %616 = vst [vmem:[#allocation2 + $0x70] sm:$0xff] %v600
        %617 = vst [vmem:[#allocation2 + $0x78] sm:$0xff] %v601
        %v618 = vld [vmem:[#allocation3] sm:$0xff]
        %v619 = vld [vmem:[#allocation3 + $0x8] sm:$0xff]
        %v620 = vld [vmem:[#allocation3 + $0x10] sm:$0xff]
        %v621 = vld [vmem:[#allocation3 + $0x18] sm:$0xff]
        %v622 = vld [vmem:[#allocation3 + $0x20] sm:$0xff]
        %v623 = vld [vmem:[#allocation3 + $0x28] sm:$0xff]
        %v624 = vld [vmem:[#allocation3 + $0x30] sm:$0xff]
        %v625 = vld [vmem:[#allocation3 + $0x38] sm:$0xff]
        %v626 = vld [vmem:[#allocation3 + $0x40] sm:$0xff]
        %v627 = vld [vmem:[#allocation3 + $0x48] sm:$0xff]
        %v628 = vld [vmem:[#allocation3 + $0x50] sm:$0xff]
        %v629 = vld [vmem:[#allocation3 + $0x58] sm:$0xff]
        %v630 = vld [vmem:[#allocation3 + $0x60] sm:$0xff]
        %v631 = vld [vmem:[#allocation3 + $0x68] sm:$0xff]
        %v632 = vld [vmem:[#allocation3 + $0x70] sm:$0xff]
        %v633 = vld [vmem:[#allocation3 + $0x78] sm:$0xff]
        %v634 = vmul.f32 %v554, %v554
        %v635 = vmul.f32 %v555, %v555
        %v636 = vmul.f32 %v556, %v556
        %v637 = vmul.f32 %v557, %v557
        %v638 = vmul.f32 %v558, %v558
        %v639 = vmul.f32 %v559, %v559
        %v640 = vmul.f32 %v560, %v560
        %v641 = vmul.f32 %v561, %v561
        %v642 = vmul.f32 %v562, %v562
        %v643 = vmul.f32 %v563, %v563
        %v644 = vmul.f32 %v564, %v564
        %v645 = vmul.f32 %v565, %v565
        %v646 = vmul.f32 %v566, %v566
        %v647 = vmul.f32 %v567, %v567
        %v648 = vmul.f32 %v568, %v568
        %v649 = vmul.f32 %v569, %v569
        %v650 = vadd.f32 %v618, %v634
        %v651 = vadd.f32 %v619, %v635
        %v652 = vadd.f32 %v620, %v636
        %v653 = vadd.f32 %v621, %v637
        %v654 = vadd.f32 %v622, %v638
        %v655 = vadd.f32 %v623, %v639
        %v656 = vadd.f32 %v624, %v640
        %v657 = vadd.f32 %v625, %v641
        %v658 = vadd.f32 %v626, %v642
        %v659 = vadd.f32 %v627, %v643
        %v660 = vadd.f32 %v628, %v644
        %v661 = vadd.f32 %v629, %v645
        %v662 = vadd.f32 %v630, %v646
        %v663 = vadd.f32 %v631, %v647
        %v664 = vadd.f32 %v632, %v648
        %v665 = vadd.f32 %v633, %v649
        %666 = vst [vmem:[#allocation3] sm:$0xff] %v650
        %667 = vst [vmem:[#allocation3 + $0x8] sm:$0xff] %v651
        %668 = vst [vmem:[#allocation3 + $0x10] sm:$0xff] %v652
        %669 = vst [vmem:[#allocation3 + $0x18] sm:$0xff] %v653
        %670 = vst [vmem:[#allocation3 + $0x20] sm:$0xff] %v654
        %671 = vst [vmem:[#allocation3 + $0x28] sm:$0xff] %v655
        %672 = vst [vmem:[#allocation3 + $0x30] sm:$0xff] %v656
        %673 = vst [vmem:[#allocation3 + $0x38] sm:$0xff] %v657
        %674 = vst [vmem:[#allocation3 + $0x40] sm:$0xff] %v658
        %675 = vst [vmem:[#allocation3 + $0x48] sm:$0xff] %v659
        %676 = vst [vmem:[#allocation3 + $0x50] sm:$0xff] %v660
        %677 = vst [vmem:[#allocation3 + $0x58] sm:$0xff] %v661
        %678 = vst [vmem:[#allocation3 + $0x60] sm:$0xff] %v662
        %679 = vst [vmem:[#allocation3 + $0x68] sm:$0xff] %v663
        %680 = vst [vmem:[#allocation3 + $0x70] sm:$0xff] %v664
        %681 = vst [vmem:[#allocation3 + $0x78] sm:$0xff] %v665
        %p682 = scmp.eq.s32.totalorder %s23, 1
        %p683 = pnand %p494, %p682
        %p684 = pneg %p683
        // Predicated region
        $region89: #{batchnorm2d.2} parent=79 // pred_check
          _
        $region90: #{batchnorm2d.2} parent=79 // pred_check_branch
          %686 = sbr.rel (%p683) target = $region92
        $region91: #{batchnorm2d.2} parent=79 // pred_region
          %v687 = vld [vmem:[#allocation2] sm:$0xff]
          %v688 = vld [vmem:[#allocation2 + $0x8] sm:$0xff]
          %v689 = vld [vmem:[#allocation2 + $0x10] sm:$0xff]
          %v690 = vld [vmem:[#allocation2 + $0x18] sm:$0xff]
          %v691 = vld [vmem:[#allocation2 + $0x20] sm:$0xff]
          %v692 = vld [vmem:[#allocation2 + $0x28] sm:$0xff]
          %v693 = vld [vmem:[#allocation2 + $0x30] sm:$0xff]
          %v694 = vld [vmem:[#allocation2 + $0x38] sm:$0xff]
          %v695 = vld [vmem:[#allocation2 + $0x40] sm:$0xff]
          %v696 = vld [vmem:[#allocation2 + $0x48] sm:$0xff]
          %v697 = vld [vmem:[#allocation2 + $0x50] sm:$0xff]
          %v698 = vld [vmem:[#allocation2 + $0x58] sm:$0xff]
          %v699 = vld [vmem:[#allocation2 + $0x60] sm:$0xff]
          %v700 = vld [vmem:[#allocation2 + $0x68] sm:$0xff]
          %v701 = vld [vmem:[#allocation2 + $0x70] sm:$0xff]
          %v702 = vld [vmem:[#allocation2 + $0x78] sm:$0xff]
          %703 = vadd.xlane.f32.xlu0 %v687
          %v704 = vpop.xlane.xlu0 %703
          %705 = vadd.xlane.f32.xlu0 %v688
          %v706 = vpop.xlane.xlu0 %705
          %707 = vadd.xlane.f32.xlu0 %v689
          %v708 = vpop.xlane.xlu0 %707
          %709 = vadd.xlane.f32.xlu0 %v690
          %v710 = vpop.xlane.xlu0 %709
          %711 = vadd.xlane.f32.xlu0 %v691
          %v712 = vpop.xlane.xlu0 %711
          %713 = vadd.xlane.f32.xlu0 %v692
          %v714 = vpop.xlane.xlu0 %713
          %715 = vadd.xlane.f32.xlu0 %v693
          %v716 = vpop.xlane.xlu0 %715
          %717 = vadd.xlane.f32.xlu0 %v694
          %v718 = vpop.xlane.xlu0 %717
          %719 = vadd.xlane.f32.xlu0 %v695
          %v720 = vpop.xlane.xlu0 %719
          %721 = vadd.xlane.f32.xlu0 %v696
          %v722 = vpop.xlane.xlu0 %721
          %723 = vadd.xlane.f32.xlu0 %v697
          %v724 = vpop.xlane.xlu0 %723
          %725 = vadd.xlane.f32.xlu0 %v698
          %v726 = vpop.xlane.xlu0 %725
          %727 = vadd.xlane.f32.xlu0 %v699
          %v728 = vpop.xlane.xlu0 %727
          %729 = vadd.xlane.f32.xlu0 %v700
          %v730 = vpop.xlane.xlu0 %729
          %731 = vadd.xlane.f32.xlu0 %v701
          %v732 = vpop.xlane.xlu0 %731
          %733 = vadd.xlane.f32.xlu0 %v702
          %v734 = vpop.xlane.xlu0 %733
          %v735 = vld [vmem:[#allocation3] sm:$0xff]
          %v736 = vld [vmem:[#allocation3 + $0x8] sm:$0xff]
          %v737 = vld [vmem:[#allocation3 + $0x10] sm:$0xff]
          %v738 = vld [vmem:[#allocation3 + $0x18] sm:$0xff]
          %v739 = vld [vmem:[#allocation3 + $0x20] sm:$0xff]
          %v740 = vld [vmem:[#allocation3 + $0x28] sm:$0xff]
          %v741 = vld [vmem:[#allocation3 + $0x30] sm:$0xff]
          %v742 = vld [vmem:[#allocation3 + $0x38] sm:$0xff]
          %v743 = vld [vmem:[#allocation3 + $0x40] sm:$0xff]
          %v744 = vld [vmem:[#allocation3 + $0x48] sm:$0xff]
          %v745 = vld [vmem:[#allocation3 + $0x50] sm:$0xff]
          %v746 = vld [vmem:[#allocation3 + $0x58] sm:$0xff]
          %v747 = vld [vmem:[#allocation3 + $0x60] sm:$0xff]
          %v748 = vld [vmem:[#allocation3 + $0x68] sm:$0xff]
          %v749 = vld [vmem:[#allocation3 + $0x70] sm:$0xff]
          %v750 = vld [vmem:[#allocation3 + $0x78] sm:$0xff]
          %751 = vadd.xlane.f32.xlu0 %v735
          %v752 = vpop.xlane.xlu0 %751
          %753 = vadd.xlane.f32.xlu0 %v736
          %v754 = vpop.xlane.xlu0 %753
          %755 = vadd.xlane.f32.xlu0 %v737
          %v756 = vpop.xlane.xlu0 %755
          %757 = vadd.xlane.f32.xlu0 %v738
          %v758 = vpop.xlane.xlu0 %757
          %759 = vadd.xlane.f32.xlu0 %v739
          %v760 = vpop.xlane.xlu0 %759
          %761 = vadd.xlane.f32.xlu0 %v740
          %v762 = vpop.xlane.xlu0 %761
          %763 = vadd.xlane.f32.xlu0 %v741
          %v764 = vpop.xlane.xlu0 %763
          %765 = vadd.xlane.f32.xlu0 %v742
          %v766 = vpop.xlane.xlu0 %765
          %767 = vadd.xlane.f32.xlu0 %v743
          %v768 = vpop.xlane.xlu0 %767
          %769 = vadd.xlane.f32.xlu0 %v744
          %v770 = vpop.xlane.xlu0 %769
          %771 = vadd.xlane.f32.xlu0 %v745
          %v772 = vpop.xlane.xlu0 %771
          %773 = vadd.xlane.f32.xlu0 %v746
          %v774 = vpop.xlane.xlu0 %773
          %775 = vadd.xlane.f32.xlu0 %v747
          %v776 = vpop.xlane.xlu0 %775
          %777 = vadd.xlane.f32.xlu0 %v748
          %v778 = vpop.xlane.xlu0 %777
          %779 = vadd.xlane.f32.xlu0 %v749
          %v780 = vpop.xlane.xlu0 %779
          %781 = vadd.xlane.f32.xlu0 %v750
          %v782 = vpop.xlane.xlu0 %781
          %v783 = vmul.f32 %v704, 0.0051020407
          %v784 = vmul.f32 %v706, 0.0051020407
          %v785 = vmul.f32 %v708, 0.0051020407
          %v786 = vmul.f32 %v710, 0.0051020407
          %v787 = vmul.f32 %v712, 0.0051020407
          %v788 = vmul.f32 %v714, 0.0051020407
          %v789 = vmul.f32 %v716, 0.0051020407
          %v790 = vmul.f32 %v718, 0.0051020407
          %v791 = vmul.f32 %v720, 0.0051020407
          %v792 = vmul.f32 %v722, 0.0051020407
          %v793 = vmul.f32 %v724, 0.0051020407
          %v794 = vmul.f32 %v726, 0.0051020407
          %v795 = vmul.f32 %v728, 0.0051020407
          %v796 = vmul.f32 %v730, 0.0051020407
          %v797 = vmul.f32 %v732, 0.0051020407
          %v798 = vmul.f32 %v734, 0.0051020407
          %v799 = vmul.f32 %v752, 0.0051020407
          %v800 = vmul.f32 %v754, 0.0051020407
          %v801 = vmul.f32 %v756, 0.0051020407
          %v802 = vmul.f32 %v758, 0.0051020407
          %v803 = vmul.f32 %v760, 0.0051020407
          %v804 = vmul.f32 %v762, 0.0051020407
          %v805 = vmul.f32 %v764, 0.0051020407
          %v806 = vmul.f32 %v766, 0.0051020407
          %v807 = vmul.f32 %v768, 0.0051020407
          %v808 = vmul.f32 %v770, 0.0051020407
          %v809 = vmul.f32 %v772, 0.0051020407
          %v810 = vmul.f32 %v774, 0.0051020407
          %v811 = vmul.f32 %v776, 0.0051020407
          %v812 = vmul.f32 %v778, 0.0051020407
          %v813 = vmul.f32 %v780, 0.0051020407
          %v814 = vmul.f32 %v782, 0.0051020407
          %v815 = vmul.f32 %v783, %v783
          %v816 = vmul.f32 %v784, %v784
          %v817 = vmul.f32 %v785, %v785
          %v818 = vmul.f32 %v786, %v786
          %v819 = vmul.f32 %v787, %v787
          %v820 = vmul.f32 %v788, %v788
          %v821 = vmul.f32 %v789, %v789
          %v822 = vmul.f32 %v790, %v790
          %v823 = vmul.f32 %v791, %v791
          %v824 = vmul.f32 %v792, %v792
          %v825 = vmul.f32 %v793, %v793
          %v826 = vmul.f32 %v794, %v794
          %v827 = vmul.f32 %v795, %v795
          %v828 = vmul.f32 %v796, %v796
          %v829 = vmul.f32 %v797, %v797
          %v830 = vmul.f32 %v798, %v798
          %v831 = vsub.f32 %v799, %v815
          %v832 = vsub.f32 %v800, %v816
          %v833 = vsub.f32 %v801, %v817
          %v834 = vsub.f32 %v802, %v818
          %v835 = vsub.f32 %v803, %v819
          %v836 = vsub.f32 %v804, %v820
          %v837 = vsub.f32 %v805, %v821
          %v838 = vsub.f32 %v806, %v822
          %v839 = vsub.f32 %v807, %v823
          %v840 = vsub.f32 %v808, %v824
          %v841 = vsub.f32 %v809, %v825
          %v842 = vsub.f32 %v810, %v826
          %v843 = vsub.f32 %v811, %v827
          %v844 = vsub.f32 %v812, %v828
          %v845 = vsub.f32 %v813, %v829
          %v846 = vsub.f32 %v814, %v830
          %v847 = vmax.f32 %v831, 0.0
          %v848 = vmax.f32 %v832, 0.0
          %v849 = vmax.f32 %v833, 0.0
          %v850 = vmax.f32 %v834, 0.0
          %v851 = vmax.f32 %v835, 0.0
          %v852 = vmax.f32 %v836, 0.0
          %v853 = vmax.f32 %v837, 0.0
          %v854 = vmax.f32 %v838, 0.0
          %v855 = vmax.f32 %v839, 0.0
          %v856 = vmax.f32 %v840, 0.0
          %v857 = vmax.f32 %v841, 0.0
          %v858 = vmax.f32 %v842, 0.0
          %v859 = vmax.f32 %v843, 0.0
          %v860 = vmax.f32 %v844, 0.0
          %v861 = vmax.f32 %v845, 0.0
          %v862 = vmax.f32 %v846, 0.0
          %v863 = vadd.f32 %v847, 1e-05
          %v864 = vadd.f32 %v848, 1e-05
          %v865 = vadd.f32 %v849, 1e-05
          %v866 = vadd.f32 %v850, 1e-05
          %v867 = vadd.f32 %v851, 1e-05
          %v868 = vadd.f32 %v852, 1e-05
          %v869 = vadd.f32 %v853, 1e-05
          %v870 = vadd.f32 %v854, 1e-05
          %v871 = vadd.f32 %v855, 1e-05
          %v872 = vadd.f32 %v856, 1e-05
          %v873 = vadd.f32 %v857, 1e-05
          %v874 = vadd.f32 %v858, 1e-05
          %v875 = vadd.f32 %v859, 1e-05
          %v876 = vadd.f32 %v860, 1e-05
          %v877 = vadd.f32 %v861, 1e-05
          %v878 = vadd.f32 %v862, 1e-05
          %v879 = vrsqrt.pop %v863
          %v880 = vrsqrt.pop %v864
          %v881 = vrsqrt.pop %v865
          %v882 = vrsqrt.pop %v866
          %v883 = vrsqrt.pop %v867
          %v884 = vrsqrt.pop %v868
          %v885 = vrsqrt.pop %v869
          %v886 = vrsqrt.pop %v870
          %v887 = vrsqrt.pop %v871
          %v888 = vrsqrt.pop %v872
          %v889 = vrsqrt.pop %v873
          %v890 = vrsqrt.pop %v874
          %v891 = vrsqrt.pop %v875
          %v892 = vrsqrt.pop %v876
          %v893 = vrsqrt.pop %v877
          %v894 = vrsqrt.pop %v878
          %v895 = vld [vmem:[%s464] sm:$0xff]
          %v896 = vld [vmem:[%s464 + $0x8] sm:$0xff]
          %v897 = vld [vmem:[%s464 + $0x10] sm:$0xff]
          %v898 = vld [vmem:[%s464 + $0x18] sm:$0xff]
          %v899 = vld [vmem:[%s464 + $0x20] sm:$0xff]
          %v900 = vld [vmem:[%s464 + $0x28] sm:$0xff]
          %v901 = vld [vmem:[%s464 + $0x30] sm:$0xff]
          %v902 = vld [vmem:[%s464 + $0x38] sm:$0xff]
          %v903 = vld [vmem:[%s464 + $0x40] sm:$0xff]
          %v904 = vld [vmem:[%s464 + $0x48] sm:$0xff]
          %v905 = vld [vmem:[%s464 + $0x50] sm:$0xff]
          %v906 = vld [vmem:[%s464 + $0x58] sm:$0xff]
          %v907 = vld [vmem:[%s464 + $0x60] sm:$0xff]
          %v908 = vld [vmem:[%s464 + $0x68] sm:$0xff]
          %v909 = vld [vmem:[%s464 + $0x70] sm:$0xff]
          %v910 = vld [vmem:[%s464 + $0x78] sm:$0xff]
          %v911 = vmul.f32 %v895, %v879
          %v912 = vmul.f32 %v896, %v880
          %v913 = vmul.f32 %v897, %v881
          %v914 = vmul.f32 %v898, %v882
          %v915 = vmul.f32 %v899, %v883
          %v916 = vmul.f32 %v900, %v884
          %v917 = vmul.f32 %v901, %v885
          %v918 = vmul.f32 %v902, %v886
          %v919 = vmul.f32 %v903, %v887
          %v920 = vmul.f32 %v904, %v888
          %v921 = vmul.f32 %v905, %v889
          %v922 = vmul.f32 %v906, %v890
          %v923 = vmul.f32 %v907, %v891
          %v924 = vmul.f32 %v908, %v892
          %v925 = vmul.f32 %v909, %v893
          %v926 = vmul.f32 %v910, %v894
          %vm927 = vcmask 7168
          %928 = vst.msk [vmem:[%s444] sm:$0xff] %vm927, %v911
          %929 = vst.msk [vmem:[%s444 + $0x8] sm:$0xff] %vm927, %v912
          %930 = vst.msk [vmem:[%s444 + $0x10] sm:$0xff] %vm927, %v913
          %931 = vst.msk [vmem:[%s444 + $0x18] sm:$0xff] %vm927, %v914
          %932 = vst.msk [vmem:[%s444 + $0x20] sm:$0xff] %vm927, %v915
          %933 = vst.msk [vmem:[%s444 + $0x28] sm:$0xff] %vm927, %v916
          %934 = vst.msk [vmem:[%s444 + $0x30] sm:$0xff] %vm927, %v917
          %935 = vst.msk [vmem:[%s444 + $0x38] sm:$0xff] %vm927, %v918
          %936 = vst.msk [vmem:[%s444 + $0x40] sm:$0xff] %vm927, %v919
          %937 = vst.msk [vmem:[%s444 + $0x48] sm:$0xff] %vm927, %v920
          %938 = vst.msk [vmem:[%s444 + $0x50] sm:$0xff] %vm927, %v921
          %939 = vst.msk [vmem:[%s444 + $0x58] sm:$0xff] %vm927, %v922
          %940 = vst.msk [vmem:[%s444 + $0x60] sm:$0xff] %vm927, %v923
          %941 = vst.msk [vmem:[%s444 + $0x68] sm:$0xff] %vm927, %v924
          %942 = vst.msk [vmem:[%s444 + $0x70] sm:$0xff] %vm927, %v925
          %943 = vst.msk [vmem:[%s444 + $0x78] sm:$0xff] %vm927, %v926
          %v944 = vld [vmem:[%s478] sm:$0xff]
          %v945 = vld [vmem:[%s478 + $0x8] sm:$0xff]
          %v946 = vld [vmem:[%s478 + $0x10] sm:$0xff]
          %v947 = vld [vmem:[%s478 + $0x18] sm:$0xff]
          %v948 = vld [vmem:[%s478 + $0x20] sm:$0xff]
          %v949 = vld [vmem:[%s478 + $0x28] sm:$0xff]
          %v950 = vld [vmem:[%s478 + $0x30] sm:$0xff]
          %v951 = vld [vmem:[%s478 + $0x38] sm:$0xff]
          %v952 = vld [vmem:[%s478 + $0x40] sm:$0xff]
          %v953 = vld [vmem:[%s478 + $0x48] sm:$0xff]
          %v954 = vld [vmem:[%s478 + $0x50] sm:$0xff]
          %v955 = vld [vmem:[%s478 + $0x58] sm:$0xff]
          %v956 = vld [vmem:[%s478 + $0x60] sm:$0xff]
          %v957 = vld [vmem:[%s478 + $0x68] sm:$0xff]
          %v958 = vld [vmem:[%s478 + $0x70] sm:$0xff]
          %v959 = vld [vmem:[%s478 + $0x78] sm:$0xff]
          %v960 = vmul.f32 %v783, %v911
          %v961 = vmul.f32 %v784, %v912
          %v962 = vmul.f32 %v785, %v913
          %v963 = vmul.f32 %v786, %v914
          %v964 = vmul.f32 %v787, %v915
          %v965 = vmul.f32 %v788, %v916
          %v966 = vmul.f32 %v789, %v917
          %v967 = vmul.f32 %v790, %v918
          %v968 = vmul.f32 %v791, %v919
          %v969 = vmul.f32 %v792, %v920
          %v970 = vmul.f32 %v793, %v921
          %v971 = vmul.f32 %v794, %v922
          %v972 = vmul.f32 %v795, %v923
          %v973 = vmul.f32 %v796, %v924
          %v974 = vmul.f32 %v797, %v925
          %v975 = vmul.f32 %v798, %v926
          %v976 = vsub.f32 %v944, %v960
          %v977 = vsub.f32 %v945, %v961
          %v978 = vsub.f32 %v946, %v962
          %v979 = vsub.f32 %v947, %v963
          %v980 = vsub.f32 %v948, %v964
          %v981 = vsub.f32 %v949, %v965
          %v982 = vsub.f32 %v950, %v966
          %v983 = vsub.f32 %v951, %v967
          %v984 = vsub.f32 %v952, %v968
          %v985 = vsub.f32 %v953, %v969
          %v986 = vsub.f32 %v954, %v970
          %v987 = vsub.f32 %v955, %v971
          %v988 = vsub.f32 %v956, %v972
          %v989 = vsub.f32 %v957, %v973
          %v990 = vsub.f32 %v958, %v974
          %v991 = vsub.f32 %v959, %v975
          %992 = vst.msk [vmem:[%s450] sm:$0xff] %vm927, %v976
          %993 = vst.msk [vmem:[%s450 + $0x8] sm:$0xff] %vm927, %v977
          %994 = vst.msk [vmem:[%s450 + $0x10] sm:$0xff] %vm927, %v978
          %995 = vst.msk [vmem:[%s450 + $0x18] sm:$0xff] %vm927, %v979
          %996 = vst.msk [vmem:[%s450 + $0x20] sm:$0xff] %vm927, %v980
          %997 = vst.msk [vmem:[%s450 + $0x28] sm:$0xff] %vm927, %v981
          %998 = vst.msk [vmem:[%s450 + $0x30] sm:$0xff] %vm927, %v982
          %999 = vst.msk [vmem:[%s450 + $0x38] sm:$0xff] %vm927, %v983
          %1000 = vst.msk [vmem:[%s450 + $0x40] sm:$0xff] %vm927, %v984
          %1001 = vst.msk [vmem:[%s450 + $0x48] sm:$0xff] %vm927, %v985
          %1002 = vst.msk [vmem:[%s450 + $0x50] sm:$0xff] %vm927, %v986
          %1003 = vst.msk [vmem:[%s450 + $0x58] sm:$0xff] %vm927, %v987
          %1004 = vst.msk [vmem:[%s450 + $0x60] sm:$0xff] %vm927, %v988
          %1005 = vst.msk [vmem:[%s450 + $0x68] sm:$0xff] %vm927, %v989
          %1006 = vst.msk [vmem:[%s450 + $0x70] sm:$0xff] %vm927, %v990
          %1007 = vst.msk [vmem:[%s450 + $0x78] sm:$0xff] %vm927, %v991
        $region92: #{batchnorm2d.2} parent=79 // pred_fallthru
          _
        %s1008 = sand.u32 %s125, 1
        %s1009 = sand.u32 %s125, 1
        %s1010 = smul.addr %s1009, 128
        %s1011 = scalar_lea.vmem [#allocation5], %s1010
        %s1012 = sand.u32 %s151, 1
        %s1013 = sand.u32 %s151, 1
        %s1014 = smul.addr %s1013, 128
        %s1015 = scalar_lea.vmem [#allocation6], %s1014
        // Predicated region
        $region93: #{batchnorm2d.2} parent=79 // pred_check
          %p1016 = pneg %p135
        $region94: #{batchnorm2d.2} parent=79 // pred_check_branch
          %1018 = sbr.rel (%p1016) target = $region96
        $region95: #{batchnorm2d.2} parent=79 // pred_region
          %s1019 = smul.u32 16, %s21
          %s1020 = ssub.s32 124, %s1019
          %p1021 = scmp.lt.s32.totalorder %s1020, 16
          %s1022 = scalar_select %p1021, %s1020, 16
          %s1023 = smul.u32 128, %s1022
          %p1024 = scmp.ne.s32.totalorder 0, %s1023
          %s1025 = smul.addr %s1019, 8
          %s1026 = scalar_lea.vmem %s3, %s1025
          // Predicated region
          $region97: #{batchnorm2d.2} parent=95 // pred_check
            %p1027 = pneg %p1024
          $region98: #{batchnorm2d.2} parent=95 // pred_check_branch
            %1029 = sbr.rel (%p1027) target = $region100
          $region99: #{batchnorm2d.2} parent=95 // pred_region
            // Predicated region
            $region101: #{batchnorm2d.2} parent=99 // pred_check
              _
            $region102: #{batchnorm2d.2} parent=99 // pred_check_branch
              %1031 = sbr.rel (0) target = $region104
            $region103: #{batchnorm2d.2} parent=99 // pred_region
              // Predicated region
              $region123: #{batchnorm2d.2} parent=103 // pred_check
                _
              $region124: #{batchnorm2d.2} parent=103 // pred_check_branch
                %1110 = sbr.rel (0) target = $region126
              $region125: #{batchnorm2d.2} parent=103 // pred_region
                %s1111 = sshrl.u32 %s1022, 4
                // While loop
                $region127: #{batchnorm2d.2} parent=125 // loop_pre_header
                  _
                $region128: #{batchnorm2d.2} parent=125 // loop_header
                  %s1113 = sphi 0, %s1115
                  %p1114 = scmp.ge.s32.totalorder %s1113, %s1111
                  %s1118 = sphi 0, %s1155
                  %s1119 = sphi %s1011, %s1158
                  %s1120 = sphi %s1026, %s1159
                $region129: #{batchnorm2d.2} parent=125 // loop_header_branch
                  %1117 = sbr.rel (%p1114) target = $region133
                $region130: #{batchnorm2d.2} parent=125 // loop_body
                  %v1121 = vld [vmem:[%s1119] sm:$0xff]
                  %1122 = vst [vmem:[%s1120] sm:$0xff] %v1121
                  %v1123 = vld [vmem:[%s1119 + $0x8] sm:$0xff]
                  %1124 = vst [vmem:[%s1120 + $0x8] sm:$0xff] %v1123
                  %v1125 = vld [vmem:[%s1119 + $0x10] sm:$0xff]
                  %1126 = vst [vmem:[%s1120 + $0x10] sm:$0xff] %v1125
                  %v1127 = vld [vmem:[%s1119 + $0x18] sm:$0xff]
                  %1128 = vst [vmem:[%s1120 + $0x18] sm:$0xff] %v1127
                  %v1129 = vld [vmem:[%s1119 + $0x20] sm:$0xff]
                  %1130 = vst [vmem:[%s1120 + $0x20] sm:$0xff] %v1129
                  %v1131 = vld [vmem:[%s1119 + $0x28] sm:$0xff]
                  %1132 = vst [vmem:[%s1120 + $0x28] sm:$0xff] %v1131
                  %v1133 = vld [vmem:[%s1119 + $0x30] sm:$0xff]
                  %1134 = vst [vmem:[%s1120 + $0x30] sm:$0xff] %v1133
                  %v1135 = vld [vmem:[%s1119 + $0x38] sm:$0xff]
                  %1136 = vst [vmem:[%s1120 + $0x38] sm:$0xff] %v1135
                  %v1137 = vld [vmem:[%s1119 + $0x40] sm:$0xff]
                  %1138 = vst [vmem:[%s1120 + $0x40] sm:$0xff] %v1137
                  %v1139 = vld [vmem:[%s1119 + $0x48] sm:$0xff]
                  %1140 = vst [vmem:[%s1120 + $0x48] sm:$0xff] %v1139
                  %v1141 = vld [vmem:[%s1119 + $0x50] sm:$0xff]
                  %1142 = vst [vmem:[%s1120 + $0x50] sm:$0xff] %v1141
                  %v1143 = vld [vmem:[%s1119 + $0x58] sm:$0xff]
                  %1144 = vst [vmem:[%s1120 + $0x58] sm:$0xff] %v1143
                  %v1145 = vld [vmem:[%s1119 + $0x60] sm:$0xff]
                  %1146 = vst [vmem:[%s1120 + $0x60] sm:$0xff] %v1145
                  %v1147 = vld [vmem:[%s1119 + $0x68] sm:$0xff]
                  %1148 = vst [vmem:[%s1120 + $0x68] sm:$0xff] %v1147
                  %v1149 = vld [vmem:[%s1119 + $0x70] sm:$0xff]
                  %1150 = vst [vmem:[%s1120 + $0x70] sm:$0xff] %v1149
                  %v1151 = vld [vmem:[%s1119 + $0x78] sm:$0xff]
                  %1152 = vst [vmem:[%s1120 + $0x78] sm:$0xff] %v1151
                  %s1153 = sadd.s32 1, %s1118
                  %p1154 = scmp.ge.s32.totalorder %s1153, %s1111
                  %s1155 = scalar_select %p1154, 0, %s1153
                  %s1156 = smul.u32 %s1155, 128
                  %s1157 = smul.u32 %s1155, 128
                  %s1158 = scalar_lea.vmem %s1011, %s1156 [#allocation5]
                  %s1159 = scalar_lea.vmem %s1026, %s1157
                $region131: #{batchnorm2d.2} parent=125 // loop_footer
                  %s1115 = sadd.s32 %s1113, 1
                $region132: #{batchnorm2d.2} parent=125 // loop_footer_branch
                  %1112 = sbr.rel target = $region128
                $region133: #{batchnorm2d.2} parent=125 // loop_exit
                  _
                %s1160 = sshrl.u32 %s1022, 4
                %s1161 = sand.u32 %s1022, 15
                %s1162 = smul.u32 %s1160, 16
                %s1163 = smul.u32 8, %s1162
                %s1164 = scalar_lea.vmem %s1011, %s1163 [#allocation5]
                %s1165 = smul.u32 8, %s1162
                %s1166 = scalar_lea.vmem %s1026, %s1165
                // While loop
                $region134: #{batchnorm2d.2} parent=125 // loop_pre_header
                  _
                $region135: #{batchnorm2d.2} parent=125 // loop_header
                  %s1168 = sphi 0, %s1170
                  %p1169 = scmp.ge.s32.totalorder %s1168, %s1161
                  %s1173 = sphi 0, %s1180
                  %s1174 = sphi %s1164, %s1183
                  %s1175 = sphi %s1166, %s1184
                $region136: #{batchnorm2d.2} parent=125 // loop_header_branch
                  %1172 = sbr.rel (%p1169) target = $region140
                $region137: #{batchnorm2d.2} parent=125 // loop_body
                  %v1176 = vld [vmem:[%s1174] sm:$0xff]
                  %1177 = vst [vmem:[%s1175] sm:$0xff] %v1176
                  %s1178 = sadd.s32 1, %s1173
                  %p1179 = scmp.ge.s32.totalorder %s1178, %s1161
                  %s1180 = scalar_select %p1179, 0, %s1178
                  %s1181 = smul.u32 %s1180, 8
                  %s1182 = smul.u32 %s1180, 8
                  %s1183 = scalar_lea.vmem %s1164, %s1181 [#allocation5]
                  %s1184 = scalar_lea.vmem %s1166, %s1182
                $region138: #{batchnorm2d.2} parent=125 // loop_footer
                  %s1170 = sadd.s32 %s1168, 1
                $region139: #{batchnorm2d.2} parent=125 // loop_footer_branch
                  %1167 = sbr.rel target = $region135
                $region140: #{batchnorm2d.2} parent=125 // loop_exit
                  _
              $region126: #{batchnorm2d.2} parent=103 // pred_fallthru
                _
              // Predicated region
              $region141: #{batchnorm2d.2} parent=103 // pred_check
                _
              $region142: #{batchnorm2d.2} parent=103 // pred_check_branch
                %1186 = sbr.rel target = $region144
              $region143: #{batchnorm2d.2} parent=103 // pred_region
                _
              $region144: #{batchnorm2d.2} parent=103 // pred_fallthru
                _
            $region104: #{batchnorm2d.2} parent=99 // pred_fallthru
              _
            // Predicated region
            $region105: #{batchnorm2d.2} parent=99 // pred_check
              _
            $region106: #{batchnorm2d.2} parent=99 // pred_check_branch
              %1033 = sbr.rel target = $region108
            $region107: #{batchnorm2d.2} parent=99 // pred_region
              %s1035 = sshrl.u32 %s1022, 4
              // While loop
              $region109: #{batchnorm2d.2} parent=107 // loop_pre_header
                _
              $region110: #{batchnorm2d.2} parent=107 // loop_header
                %s1037 = sphi 0, %s1039
                %p1038 = scmp.ge.s32.totalorder %s1037, %s1035
                %s1042 = sphi 0, %s1079
                %s1043 = sphi %s1011, %s1082
                %s1044 = sphi %s1026, %s1083
              $region111: #{batchnorm2d.2} parent=107 // loop_header_branch
                %1041 = sbr.rel (%p1038) target = $region115
              $region112: #{batchnorm2d.2} parent=107 // loop_body
                %v1045 = vld [vmem:[%s1043] sm:$0xff]
                %1046 = vst [vmem:[%s1044] sm:$0xff] %v1045
                %v1047 = vld [vmem:[%s1043 + $0x8] sm:$0xff]
                %1048 = vst [vmem:[%s1044 + $0x8] sm:$0xff] %v1047
                %v1049 = vld [vmem:[%s1043 + $0x10] sm:$0xff]
                %1050 = vst [vmem:[%s1044 + $0x10] sm:$0xff] %v1049
                %v1051 = vld [vmem:[%s1043 + $0x18] sm:$0xff]
                %1052 = vst [vmem:[%s1044 + $0x18] sm:$0xff] %v1051
                %v1053 = vld [vmem:[%s1043 + $0x20] sm:$0xff]
                %1054 = vst [vmem:[%s1044 + $0x20] sm:$0xff] %v1053
                %v1055 = vld [vmem:[%s1043 + $0x28] sm:$0xff]
                %1056 = vst [vmem:[%s1044 + $0x28] sm:$0xff] %v1055
                %v1057 = vld [vmem:[%s1043 + $0x30] sm:$0xff]
                %1058 = vst [vmem:[%s1044 + $0x30] sm:$0xff] %v1057
                %v1059 = vld [vmem:[%s1043 + $0x38] sm:$0xff]
                %1060 = vst [vmem:[%s1044 + $0x38] sm:$0xff] %v1059
                %v1061 = vld [vmem:[%s1043 + $0x40] sm:$0xff]
                %1062 = vst [vmem:[%s1044 + $0x40] sm:$0xff] %v1061
                %v1063 = vld [vmem:[%s1043 + $0x48] sm:$0xff]
                %1064 = vst [vmem:[%s1044 + $0x48] sm:$0xff] %v1063
                %v1065 = vld [vmem:[%s1043 + $0x50] sm:$0xff]
                %1066 = vst [vmem:[%s1044 + $0x50] sm:$0xff] %v1065
                %v1067 = vld [vmem:[%s1043 + $0x58] sm:$0xff]
                %1068 = vst [vmem:[%s1044 + $0x58] sm:$0xff] %v1067
                %v1069 = vld [vmem:[%s1043 + $0x60] sm:$0xff]
                %1070 = vst [vmem:[%s1044 + $0x60] sm:$0xff] %v1069
                %v1071 = vld [vmem:[%s1043 + $0x68] sm:$0xff]
                %1072 = vst [vmem:[%s1044 + $0x68] sm:$0xff] %v1071
                %v1073 = vld [vmem:[%s1043 + $0x70] sm:$0xff]
                %1074 = vst [vmem:[%s1044 + $0x70] sm:$0xff] %v1073
                %v1075 = vld [vmem:[%s1043 + $0x78] sm:$0xff]
                %1076 = vst [vmem:[%s1044 + $0x78] sm:$0xff] %v1075
                %s1077 = sadd.s32 1, %s1042
                %p1078 = scmp.ge.s32.totalorder %s1077, %s1035
                %s1079 = scalar_select %p1078, 0, %s1077
                %s1080 = smul.u32 %s1079, 128
                %s1081 = smul.u32 %s1079, 128
                %s1082 = scalar_lea.vmem %s1011, %s1080 [#allocation5]
                %s1083 = scalar_lea.vmem %s1026, %s1081
              $region113: #{batchnorm2d.2} parent=107 // loop_footer
                %s1039 = sadd.s32 %s1037, 1
              $region114: #{batchnorm2d.2} parent=107 // loop_footer_branch
                %1036 = sbr.rel target = $region110
              $region115: #{batchnorm2d.2} parent=107 // loop_exit
                _
              %s1084 = sshrl.u32 %s1022, 4
              %s1085 = sand.u32 %s1022, 15
              %s1086 = smul.u32 %s1084, 16
              %s1087 = smul.u32 8, %s1086
              %s1088 = scalar_lea.vmem %s1011, %s1087 [#allocation5]
              %s1089 = smul.u32 8, %s1086
              %s1090 = scalar_lea.vmem %s1026, %s1089
              // While loop
              $region116: #{batchnorm2d.2} parent=107 // loop_pre_header
                _
              $region117: #{batchnorm2d.2} parent=107 // loop_header
                %s1092 = sphi 0, %s1094
                %p1093 = scmp.ge.s32.totalorder %s1092, %s1085
                %s1097 = sphi 0, %s1104
                %s1098 = sphi %s1088, %s1107
                %s1099 = sphi %s1090, %s1108
              $region118: #{batchnorm2d.2} parent=107 // loop_header_branch
                %1096 = sbr.rel (%p1093) target = $region122
              $region119: #{batchnorm2d.2} parent=107 // loop_body
                %v1100 = vld [vmem:[%s1098] sm:$0xff]
                %1101 = vst [vmem:[%s1099] sm:$0xff] %v1100
                %s1102 = sadd.s32 1, %s1097
                %p1103 = scmp.ge.s32.totalorder %s1102, %s1085
                %s1104 = scalar_select %p1103, 0, %s1102
                %s1105 = smul.u32 %s1104, 8
                %s1106 = smul.u32 %s1104, 8
                %s1107 = scalar_lea.vmem %s1088, %s1105 [#allocation5]
                %s1108 = scalar_lea.vmem %s1090, %s1106
              $region120: #{batchnorm2d.2} parent=107 // loop_footer
                %s1094 = sadd.s32 %s1092, 1
              $region121: #{batchnorm2d.2} parent=107 // loop_footer_branch
                %1091 = sbr.rel target = $region117
              $region122: #{batchnorm2d.2} parent=107 // loop_exit
                _
            $region108: #{batchnorm2d.2} parent=99 // pred_fallthru
              _
          $region100: #{batchnorm2d.2} parent=95 // pred_fallthru
            _
          %1187 = vnop
        $region96: #{batchnorm2d.2} parent=79 // pred_fallthru
          _
        // Predicated region
        $region145: #{batchnorm2d.2} parent=79 // pred_check
          %p1188 = pneg %p161
        $region146: #{batchnorm2d.2} parent=79 // pred_check_branch
          %1190 = sbr.rel (%p1188) target = $region148
        $region147: #{batchnorm2d.2} parent=79 // pred_region
          %s1191 = smul.u32 16, %s21
          %s1192 = ssub.s32 124, %s1191
          %p1193 = scmp.lt.s32.totalorder %s1192, 16
          %s1194 = scalar_select %p1193, %s1192, 16
          %s1195 = smul.u32 128, %s1194
          %p1196 = scmp.ne.s32.totalorder 0, %s1195
          %s1197 = smul.addr %s1191, 8
          %s1198 = scalar_lea.vmem %s4, %s1197
          // Predicated region
          $region149: #{batchnorm2d.2} parent=147 // pred_check
            %p1199 = pneg %p1196
          $region150: #{batchnorm2d.2} parent=147 // pred_check_branch
            %1201 = sbr.rel (%p1199) target = $region152
          $region151: #{batchnorm2d.2} parent=147 // pred_region
            // Predicated region
            $region153: #{batchnorm2d.2} parent=151 // pred_check
              _
            $region154: #{batchnorm2d.2} parent=151 // pred_check_branch
              %1203 = sbr.rel (0) target = $region156
            $region155: #{batchnorm2d.2} parent=151 // pred_region
              // Predicated region
              $region175: #{batchnorm2d.2} parent=155 // pred_check
                _
              $region176: #{batchnorm2d.2} parent=155 // pred_check_branch
                %1282 = sbr.rel (0) target = $region178
              $region177: #{batchnorm2d.2} parent=155 // pred_region
                %s1283 = sshrl.u32 %s1194, 4
                // While loop
                $region179: #{batchnorm2d.2} parent=177 // loop_pre_header
                  _
                $region180: #{batchnorm2d.2} parent=177 // loop_header
                  %s1285 = sphi 0, %s1287
                  %p1286 = scmp.ge.s32.totalorder %s1285, %s1283
                  %s1290 = sphi 0, %s1327
                  %s1291 = sphi %s1015, %s1330
                  %s1292 = sphi %s1198, %s1331
                $region181: #{batchnorm2d.2} parent=177 // loop_header_branch
                  %1289 = sbr.rel (%p1286) target = $region185
                $region182: #{batchnorm2d.2} parent=177 // loop_body
                  %v1293 = vld [vmem:[%s1291] sm:$0xff]
                  %1294 = vst [vmem:[%s1292] sm:$0xff] %v1293
                  %v1295 = vld [vmem:[%s1291 + $0x8] sm:$0xff]
                  %1296 = vst [vmem:[%s1292 + $0x8] sm:$0xff] %v1295
                  %v1297 = vld [vmem:[%s1291 + $0x10] sm:$0xff]
                  %1298 = vst [vmem:[%s1292 + $0x10] sm:$0xff] %v1297
                  %v1299 = vld [vmem:[%s1291 + $0x18] sm:$0xff]
                  %1300 = vst [vmem:[%s1292 + $0x18] sm:$0xff] %v1299
                  %v1301 = vld [vmem:[%s1291 + $0x20] sm:$0xff]
                  %1302 = vst [vmem:[%s1292 + $0x20] sm:$0xff] %v1301
                  %v1303 = vld [vmem:[%s1291 + $0x28] sm:$0xff]
                  %1304 = vst [vmem:[%s1292 + $0x28] sm:$0xff] %v1303
                  %v1305 = vld [vmem:[%s1291 + $0x30] sm:$0xff]
                  %1306 = vst [vmem:[%s1292 + $0x30] sm:$0xff] %v1305
                  %v1307 = vld [vmem:[%s1291 + $0x38] sm:$0xff]
                  %1308 = vst [vmem:[%s1292 + $0x38] sm:$0xff] %v1307
                  %v1309 = vld [vmem:[%s1291 + $0x40] sm:$0xff]
                  %1310 = vst [vmem:[%s1292 + $0x40] sm:$0xff] %v1309
                  %v1311 = vld [vmem:[%s1291 + $0x48] sm:$0xff]
                  %1312 = vst [vmem:[%s1292 + $0x48] sm:$0xff] %v1311
                  %v1313 = vld [vmem:[%s1291 + $0x50] sm:$0xff]
                  %1314 = vst [vmem:[%s1292 + $0x50] sm:$0xff] %v1313
                  %v1315 = vld [vmem:[%s1291 + $0x58] sm:$0xff]
                  %1316 = vst [vmem:[%s1292 + $0x58] sm:$0xff] %v1315
                  %v1317 = vld [vmem:[%s1291 + $0x60] sm:$0xff]
                  %1318 = vst [vmem:[%s1292 + $0x60] sm:$0xff] %v1317
                  %v1319 = vld [vmem:[%s1291 + $0x68] sm:$0xff]
                  %1320 = vst [vmem:[%s1292 + $0x68] sm:$0xff] %v1319
                  %v1321 = vld [vmem:[%s1291 + $0x70] sm:$0xff]
                  %1322 = vst [vmem:[%s1292 + $0x70] sm:$0xff] %v1321
                  %v1323 = vld [vmem:[%s1291 + $0x78] sm:$0xff]
                  %1324 = vst [vmem:[%s1292 + $0x78] sm:$0xff] %v1323
                  %s1325 = sadd.s32 1, %s1290
                  %p1326 = scmp.ge.s32.totalorder %s1325, %s1283
                  %s1327 = scalar_select %p1326, 0, %s1325
                  %s1328 = smul.u32 %s1327, 128
                  %s1329 = smul.u32 %s1327, 128
                  %s1330 = scalar_lea.vmem %s1015, %s1328 [#allocation6]
                  %s1331 = scalar_lea.vmem %s1198, %s1329
                $region183: #{batchnorm2d.2} parent=177 // loop_footer
                  %s1287 = sadd.s32 %s1285, 1
                $region184: #{batchnorm2d.2} parent=177 // loop_footer_branch
                  %1284 = sbr.rel target = $region180
                $region185: #{batchnorm2d.2} parent=177 // loop_exit
                  _
                %s1332 = sshrl.u32 %s1194, 4
                %s1333 = sand.u32 %s1194, 15
                %s1334 = smul.u32 %s1332, 16
                %s1335 = smul.u32 8, %s1334
                %s1336 = scalar_lea.vmem %s1015, %s1335 [#allocation6]
                %s1337 = smul.u32 8, %s1334
                %s1338 = scalar_lea.vmem %s1198, %s1337
                // While loop
                $region186: #{batchnorm2d.2} parent=177 // loop_pre_header
                  _
                $region187: #{batchnorm2d.2} parent=177 // loop_header
                  %s1340 = sphi 0, %s1342
                  %p1341 = scmp.ge.s32.totalorder %s1340, %s1333
                  %s1345 = sphi 0, %s1352
                  %s1346 = sphi %s1336, %s1355
                  %s1347 = sphi %s1338, %s1356
                $region188: #{batchnorm2d.2} parent=177 // loop_header_branch
                  %1344 = sbr.rel (%p1341) target = $region192
                $region189: #{batchnorm2d.2} parent=177 // loop_body
                  %v1348 = vld [vmem:[%s1346] sm:$0xff]
                  %1349 = vst [vmem:[%s1347] sm:$0xff] %v1348
                  %s1350 = sadd.s32 1, %s1345
                  %p1351 = scmp.ge.s32.totalorder %s1350, %s1333
                  %s1352 = scalar_select %p1351, 0, %s1350
                  %s1353 = smul.u32 %s1352, 8
                  %s1354 = smul.u32 %s1352, 8
                  %s1355 = scalar_lea.vmem %s1336, %s1353 [#allocation6]
                  %s1356 = scalar_lea.vmem %s1338, %s1354
                $region190: #{batchnorm2d.2} parent=177 // loop_footer
                  %s1342 = sadd.s32 %s1340, 1
                $region191: #{batchnorm2d.2} parent=177 // loop_footer_branch
                  %1339 = sbr.rel target = $region187
                $region192: #{batchnorm2d.2} parent=177 // loop_exit
                  _
              $region178: #{batchnorm2d.2} parent=155 // pred_fallthru
                _
              // Predicated region
              $region193: #{batchnorm2d.2} parent=155 // pred_check
                _
              $region194: #{batchnorm2d.2} parent=155 // pred_check_branch
                %1358 = sbr.rel target = $region196
              $region195: #{batchnorm2d.2} parent=155 // pred_region
                _
              $region196: #{batchnorm2d.2} parent=155 // pred_fallthru
                _
            $region156: #{batchnorm2d.2} parent=151 // pred_fallthru
              _
            // Predicated region
            $region157: #{batchnorm2d.2} parent=151 // pred_check
              _
            $region158: #{batchnorm2d.2} parent=151 // pred_check_branch
              %1205 = sbr.rel target = $region160
            $region159: #{batchnorm2d.2} parent=151 // pred_region
              %s1207 = sshrl.u32 %s1194, 4
              // While loop
              $region161: #{batchnorm2d.2} parent=159 // loop_pre_header
                _
              $region162: #{batchnorm2d.2} parent=159 // loop_header
                %s1209 = sphi 0, %s1211
                %p1210 = scmp.ge.s32.totalorder %s1209, %s1207
                %s1214 = sphi 0, %s1251
                %s1215 = sphi %s1015, %s1254
                %s1216 = sphi %s1198, %s1255
              $region163: #{batchnorm2d.2} parent=159 // loop_header_branch
                %1213 = sbr.rel (%p1210) target = $region167
              $region164: #{batchnorm2d.2} parent=159 // loop_body
                %v1217 = vld [vmem:[%s1215] sm:$0xff]
                %1218 = vst [vmem:[%s1216] sm:$0xff] %v1217
                %v1219 = vld [vmem:[%s1215 + $0x8] sm:$0xff]
                %1220 = vst [vmem:[%s1216 + $0x8] sm:$0xff] %v1219
                %v1221 = vld [vmem:[%s1215 + $0x10] sm:$0xff]
                %1222 = vst [vmem:[%s1216 + $0x10] sm:$0xff] %v1221
                %v1223 = vld [vmem:[%s1215 + $0x18] sm:$0xff]
                %1224 = vst [vmem:[%s1216 + $0x18] sm:$0xff] %v1223
                %v1225 = vld [vmem:[%s1215 + $0x20] sm:$0xff]
                %1226 = vst [vmem:[%s1216 + $0x20] sm:$0xff] %v1225
                %v1227 = vld [vmem:[%s1215 + $0x28] sm:$0xff]
                %1228 = vst [vmem:[%s1216 + $0x28] sm:$0xff] %v1227
                %v1229 = vld [vmem:[%s1215 + $0x30] sm:$0xff]
                %1230 = vst [vmem:[%s1216 + $0x30] sm:$0xff] %v1229
                %v1231 = vld [vmem:[%s1215 + $0x38] sm:$0xff]
                %1232 = vst [vmem:[%s1216 + $0x38] sm:$0xff] %v1231
                %v1233 = vld [vmem:[%s1215 + $0x40] sm:$0xff]
                %1234 = vst [vmem:[%s1216 + $0x40] sm:$0xff] %v1233
                %v1235 = vld [vmem:[%s1215 + $0x48] sm:$0xff]
                %1236 = vst [vmem:[%s1216 + $0x48] sm:$0xff] %v1235
                %v1237 = vld [vmem:[%s1215 + $0x50] sm:$0xff]
                %1238 = vst [vmem:[%s1216 + $0x50] sm:$0xff] %v1237
                %v1239 = vld [vmem:[%s1215 + $0x58] sm:$0xff]
                %1240 = vst [vmem:[%s1216 + $0x58] sm:$0xff] %v1239
                %v1241 = vld [vmem:[%s1215 + $0x60] sm:$0xff]
                %1242 = vst [vmem:[%s1216 + $0x60] sm:$0xff] %v1241
                %v1243 = vld [vmem:[%s1215 + $0x68] sm:$0xff]
                %1244 = vst [vmem:[%s1216 + $0x68] sm:$0xff] %v1243
                %v1245 = vld [vmem:[%s1215 + $0x70] sm:$0xff]
                %1246 = vst [vmem:[%s1216 + $0x70] sm:$0xff] %v1245
                %v1247 = vld [vmem:[%s1215 + $0x78] sm:$0xff]
                %1248 = vst [vmem:[%s1216 + $0x78] sm:$0xff] %v1247
                %s1249 = sadd.s32 1, %s1214
                %p1250 = scmp.ge.s32.totalorder %s1249, %s1207
                %s1251 = scalar_select %p1250, 0, %s1249
                %s1252 = smul.u32 %s1251, 128
                %s1253 = smul.u32 %s1251, 128
                %s1254 = scalar_lea.vmem %s1015, %s1252 [#allocation6]
                %s1255 = scalar_lea.vmem %s1198, %s1253
              $region165: #{batchnorm2d.2} parent=159 // loop_footer
                %s1211 = sadd.s32 %s1209, 1
              $region166: #{batchnorm2d.2} parent=159 // loop_footer_branch
                %1208 = sbr.rel target = $region162
              $region167: #{batchnorm2d.2} parent=159 // loop_exit
                _
              %s1256 = sshrl.u32 %s1194, 4
              %s1257 = sand.u32 %s1194, 15
              %s1258 = smul.u32 %s1256, 16
              %s1259 = smul.u32 8, %s1258
              %s1260 = scalar_lea.vmem %s1015, %s1259 [#allocation6]
              %s1261 = smul.u32 8, %s1258
              %s1262 = scalar_lea.vmem %s1198, %s1261
              // While loop
              $region168: #{batchnorm2d.2} parent=159 // loop_pre_header
                _
              $region169: #{batchnorm2d.2} parent=159 // loop_header
                %s1264 = sphi 0, %s1266
                %p1265 = scmp.ge.s32.totalorder %s1264, %s1257
                %s1269 = sphi 0, %s1276
                %s1270 = sphi %s1260, %s1279
                %s1271 = sphi %s1262, %s1280
              $region170: #{batchnorm2d.2} parent=159 // loop_header_branch
                %1268 = sbr.rel (%p1265) target = $region174
              $region171: #{batchnorm2d.2} parent=159 // loop_body
                %v1272 = vld [vmem:[%s1270] sm:$0xff]
                %1273 = vst [vmem:[%s1271] sm:$0xff] %v1272
                %s1274 = sadd.s32 1, %s1269
                %p1275 = scmp.ge.s32.totalorder %s1274, %s1257
                %s1276 = scalar_select %p1275, 0, %s1274
                %s1277 = smul.u32 %s1276, 8
                %s1278 = smul.u32 %s1276, 8
                %s1279 = scalar_lea.vmem %s1260, %s1277 [#allocation6]
                %s1280 = scalar_lea.vmem %s1262, %s1278
              $region172: #{batchnorm2d.2} parent=159 // loop_footer
                %s1266 = sadd.s32 %s1264, 1
              $region173: #{batchnorm2d.2} parent=159 // loop_footer_branch
                %1263 = sbr.rel target = $region169
              $region174: #{batchnorm2d.2} parent=159 // loop_exit
                _
            $region160: #{batchnorm2d.2} parent=151 // pred_fallthru
              _
          $region152: #{batchnorm2d.2} parent=147 // pred_fallthru
            _
          %1359 = vnop
        $region148: #{batchnorm2d.2} parent=79 // pred_fallthru
          _
      $region80: #{batchnorm2d.2} parent=5 // pred_fallthru
        _
      %p1360 = scmp.le.s32.totalorder 2, %s11
      // Predicated region
      $region197: #{batchnorm2d.2} parent=5 // pred_check
        %p1361 = pneg %p1360
      $region198: #{batchnorm2d.2} parent=5 // pred_check_branch
        %1363 = sbr.rel (%p1361) target = $region200
      $region199: #{batchnorm2d.2} parent=5 // pred_region
        %s1364 = ssub.s32 %s11, 2
        // Predicated region
        $region201: #{batchnorm2d.2} parent=199 // pred_check
          %p1365 = pneg %p141
        $region202: #{batchnorm2d.2} parent=199 // pred_check_branch
          %1367 = sbr.rel (%p1365) target = $region204
        $region203: #{batchnorm2d.2} parent=199 // pred_region
          %s1368 = sand.u32 %s126, 1
          %s1369 = sand.u32 %s126, 1
          %s1370 = smul.addr %s1369, 128
          %s1371 = scalar_lea.vmem [#allocation5], %s1370
        $region204: #{batchnorm2d.2} parent=199 // pred_fallthru
          _
        // Predicated region
        $region205: #{batchnorm2d.2} parent=199 // pred_check
          %p1372 = pneg %p167
        $region206: #{batchnorm2d.2} parent=199 // pred_check_branch
          %1374 = sbr.rel (%p1372) target = $region208
        $region207: #{batchnorm2d.2} parent=199 // pred_region
          %s1375 = sand.u32 %s152, 1
          %s1376 = sand.u32 %s152, 1
          %s1377 = smul.addr %s1376, 128
          %s1378 = scalar_lea.vmem [#allocation6], %s1377
        $region208: #{batchnorm2d.2} parent=199 // pred_fallthru
          _
      $region200: #{batchnorm2d.2} parent=5 // pred_fallthru
        _
    $region6: #{batchnorm2d.2} parent=1 // loop_footer
      %s15 = sadd.s32 1, %s11
    $region7: #{batchnorm2d.2} parent=1 // loop_footer_branch
      %10 = sbr.rel target = $region3
    $region8: #{batchnorm2d.2} parent=1 // loop_exit
      _

</llo_original>
